<compile_context>
chip_gen: v7x
topology: tpu7x:2x2x1
jax: 0.10.0
libtpu: 0.0.40
codegen_flags: <defaults>
</compile_context>

<pallas_src>
import functools
import math

import jax
import jax.numpy as jnp
from jax.experimental import pallas as pl
from jax.experimental.pallas import tpu as pltpu

# CNNAddMargin default hyperparameters.
S_SCALE = 70.0
M_MARGIN = 0.25
BN_EPS = 1e-5        # PyTorch BatchNorm default eps
NORM_EPS = 1e-12     # F.normalize default eps


def _default_vmem_limit():
    """Generation-aware scoped-VMEM budget: ~75% of physical VMEM
    (~48 MiB on v7x's 64 MiB, ~96 MiB on v5e/v6e's 128 MiB)."""
    cap = 64 * 1024 * 1024
    try:
        info = pltpu.get_tpu_info()
        cap = int(getattr(info, "vmem_capacity_bytes", cap))
    except Exception:
        pass
    return (cap * 3) // 4


VMEM_LIMIT = _default_vmem_limit()
_BIG_VMEM = VMEM_LIMIT >= 80 * 1024 * 1024   # v5e/v6e-class budget


def _pick_tile(dim, cap, align):
    """Largest tile <= cap that divides `dim` and is a multiple of `align`;
    falls back to the full dim (a block equal to the array dim is always legal)."""
    best = 0
    t = align
    limit = min(cap, dim)
    while t <= limit:
        if dim % t == 0:
            best = t
        t += align
    return best if best > 0 else dim


# ----------------------------------------------------------------------------
# Kernel 1: stem conv (im2col matmul) + per-M-tile BatchNorm2d partial stats.
#   grid = (M_tiles, K_tiles); M is "parallel" (per-tile stats, no cross-tile
#   accumulation), K (reduction) is "arbitrary" and last.
#   Outputs: conv activations (M, D) bf16 and partial stats (M_tiles, 2, D) f32.
# ----------------------------------------------------------------------------
def _conv_stats_kernel(p_ref, w_ref, conv_ref, pstats_ref, *scratch, nk):
    k = pl.program_id(1)
    prod = jnp.dot(p_ref[...], w_ref[...], preferred_element_type=jnp.float32)

    def finalize(y):
        conv_ref[...] = y.astype(conv_ref.dtype)
        # TODO(synk): Welford-style combine of per-tile (mean, M2) partials would
        # be more robust than sum / sum-of-squares for very large M.
        pstats_ref[0:1, :] = jnp.sum(y, axis=0, keepdims=True)
        pstats_ref[1:2, :] = jnp.sum(y * y, axis=0, keepdims=True)

    if nk == 1:
        # Single reduction step: no accumulator scratch, no zero-init, no RMW.
        finalize(prod)
    else:
        acc_ref = scratch[0]

        @pl.when(k == 0)
        def _():
            acc_ref[...] = prod

        @pl.when(k > 0)
        def _():
            acc_ref[...] += prod

        @pl.when(k == nk - 1)
        def _():
            finalize(acc_ref[...])


def conv_bn_stats(patches_bf16, w_t_bf16):
    m, k = patches_bf16.shape
    d = w_t_bf16.shape[1]
    tm_cap = 1024 if _BIG_VMEM else 512
    tm = _pick_tile(m, tm_cap, 8)
    tk = _pick_tile(k, 256, 128)          # K=Cin*9=27 for the stem -> full K tile
    grid = (m // tm, k // tk)
    nk = grid[1]
    kern = functools.partial(_conv_stats_kernel, nk=nk)
    scratch = [] if nk == 1 else [pltpu.VMEM((tm, d), jnp.float32)]
    return pl.pallas_call(
        kern,
        out_shape=(jax.ShapeDtypeStruct((m, d), jnp.bfloat16),
                   jax.ShapeDtypeStruct((grid[0], 2, d), jnp.float32)),
        grid_spec=pltpu.PrefetchScalarGridSpec(
            num_scalar_prefetch=0,
            grid=grid,
            in_specs=[pl.BlockSpec((tm, tk), lambda i, kk: (i, kk)),
                      pl.BlockSpec((tk, d), lambda i, kk: (kk, 0))],
            out_specs=[pl.BlockSpec((tm, d), lambda i, kk: (i, 0)),
                       pl.BlockSpec((None, 2, d), lambda i, kk: (i, 0, 0))],
            scratch_shapes=scratch),
        compiler_params=pltpu.CompilerParams(
            dimension_semantics=("parallel", "arbitrary"),
            vmem_limit_bytes=VMEM_LIMIT),
    )(patches_bf16, w_t_bf16)


# ----------------------------------------------------------------------------
# Kernel 2: BN2d-apply + ReLU + AdaptiveAvgPool2d(1) partial sums, fused.
#   grid = (N, HW_tiles); N is "parallel", HW is "arbitrary"; the per-image
#   pooled sum accumulates directly in its (1, 1, D) output block.
#   BN2d scale/shift are precomputed (grid-invariant) and passed in.
# ----------------------------------------------------------------------------
def _bn_relu_pool_kernel(x_ref, scale_ref, shift_ref, o_ref):
    h = pl.program_id(1)
    y = jnp.maximum(x_ref[0].astype(jnp.float32) * scale_ref[...] + shift_ref[...],
                    0.0)                                     # (thw, D) BN+ReLU
    tile_sum = jnp.sum(y, axis=0, keepdims=True)             # (1, D) partial pool

    @pl.when(h == 0)
    def _():
        o_ref[0] = tile_sum

    @pl.when(h > 0)
    def _():
        o_ref[0] += tile_sum


def bn_relu_pool(conv_nhwd, scale, shift):
    n, hw, d = conv_nhwd.shape
    thw_cap = 1024 if _BIG_VMEM else 512   # large tiles: pure HBM streaming stage
    thw = _pick_tile(hw, thw_cap, 8)
    grid = (n, hw // thw)
    const = lambda i, h: (0, 0)
    return pl.pallas_call(
        _bn_relu_pool_kernel,
        out_shape=jax.ShapeDtypeStruct((n, 1, d), jnp.float32),
        grid_spec=pltpu.PrefetchScalarGridSpec(
            num_scalar_prefetch=0,
            grid=grid,
            in_specs=[pl.BlockSpec((1, thw, d), lambda i, h: (i, h, 0)),
                      pl.BlockSpec((1, d), const),
                      pl.BlockSpec((1, d), const)],
            out_specs=pl.BlockSpec((1, 1, d), lambda i, h: (i, 0, 0))),
        compiler_params=pltpu.CompilerParams(
            dimension_semantics=("parallel", "arbitrary"),
            vmem_limit_bytes=VMEM_LIMIT),
    )(conv_nhwd, scale, shift)


# ----------------------------------------------------------------------------
# Kernel 3: additive-margin cosine head, tiled over classes (native (C, D) W).
#   x is pre-normalized (unit rows, bf16) in the wrapper; W rows are normalized
#   per tile with an exact rsqrt, then x @ W_hat^T runs on the MXU.
#   output = where(class == label, cosine - m, cosine) * s
# ----------------------------------------------------------------------------
def _add_margin_kernel(xn_ref, w_ref, lbl_ref, o_ref, *, c_tile):
    j = pl.program_id(0)
    w = w_ref[...].astype(jnp.float32)                       # (tc, D)
    inv_wn = jax.lax.rsqrt(
        jnp.maximum(jnp.sum(w * w, axis=1, keepdims=True), NORM_EPS * NORM_EPS))
    w_hat = (w * inv_wn).astype(jnp.bfloat16)                # row-normalized W tile
    cosine = jax.lax.dot_general(
        xn_ref[...], w_hat, (((1,), (1,)), ((), ())),
        preferred_element_type=jnp.float32)                  # (N, tc) on the MXU
    ids = jax.lax.broadcasted_iota(jnp.int32, cosine.shape, 1) + j * c_tile
    one_hot = ids == lbl_ref[...]                            # (N, 1) labels broadcast
    o_ref[...] = jnp.where(one_hot, cosine - M_MARGIN, cosine) * S_SCALE


def add_margin_head(xn_bf16, cls_w, labels):
    n, d = xn_bf16.shape
    c = cls_w.shape[0]
    tc = _pick_tile(c, 512, 128)                             # lane-dense class tiles
    grid = (c // tc,)
    label2d = labels.astype(jnp.int32).reshape(n, 1)
    # TODO(synk): labels could move to scalar-prefetch SMEM to avoid the 1-lane
    # (N, 1) VMEM block; kept as VMEM for simplicity (resident across the grid).
    kern = functools.partial(_add_margin_kernel, c_tile=tc)
    return pl.pallas_call(
        kern,
        out_shape=jax.ShapeDtypeStruct((n, c), jnp.float32),
        grid_spec=pltpu.PrefetchScalarGridSpec(
            num_scalar_prefetch=0,
            grid=grid,
            in_specs=[pl.BlockSpec((n, d), lambda j: (0, 0)),
                      pl.BlockSpec((tc, d), lambda j: (j, 0)),
                      pl.BlockSpec((n, 1), lambda j: (0, 0))],
            out_specs=pl.BlockSpec((n, tc), lambda j: (0, j))),
        compiler_params=pltpu.CompilerParams(
            dimension_semantics=("parallel",),
            vmem_limit_bytes=VMEM_LIMIT),
    )(xn_bf16, cls_w, label2d)


# ----------------------------------------------------------------------------
# Full forward (training path): returns (x, output) like CNNAddMargin.forward.
# ----------------------------------------------------------------------------
def cnn_add_margin_forward(x_nchw, params, labels):
    n = x_nchw.shape[0]
    d = params["conv_w"].shape[0]

    # im2col directly in (N, OH, OW, K) layout; patch feature ordering is
    # channel-major (Cin, kh, kw), matching conv_w.reshape(D, Cin*KH*KW) below.
    x_nhwc = jnp.transpose(x_nchw, (0, 2, 3, 1))
    patches = jax.lax.conv_general_dilated_patches(
        x_nhwc, filter_shape=(3, 3), window_strides=(2, 2),
        padding=((1, 1), (1, 1)),
        dimension_numbers=("NHWC", "HWIO", "NHWC"))
    _, oh, ow, k = patches.shape
    m = n * oh * ow
    patches = patches.reshape(m, k).astype(jnp.bfloat16)
    w_t = params["conv_w"].reshape(d, k).T.astype(jnp.bfloat16)      # (K, D), tiny

    # Kernel 1: conv matmul (bf16 out) + per-M-tile BN2d partial stats.
    conv_flat, pstats = conv_bn_stats(patches, w_t)    # (M, D) bf16, (Mt, 2, D) f32

    # Reduce partial stats and fold BN2d into scale/shift once (tiny (D,) JAX ops).
    stats = jnp.sum(pstats, axis=0)                    # (2, D)
    mean = stats[0:1, :] / m
    var = stats[1:2, :] / m - mean * mean              # biased var, as BatchNorm2d
    scale = jax.lax.rsqrt(var + BN_EPS) * params["bn2d_gamma"]
    shift = params["bn2d_beta"] - mean * scale

    # Kernel 2: BN2d-apply + ReLU + global-average-pool partial sums.
    conv_nhwd = conv_flat.reshape(n, oh * ow, d)       # metadata-only reshape
    pooled_sum = bn_relu_pool(conv_nhwd, scale, shift) # (N, 1, D) f32
    pooled = pooled_sum.reshape(n, d) / float(oh * ow) # AdaptiveAvgPool2d(1)

    # BN1d (training-mode batch stats) + F.normalize: O(N*D), plain JAX.
    # TODO(synk): running-mean/var tracking for eval mode is not modeled.
    mu = jnp.mean(pooled, axis=0, keepdims=True)
    var1 = jnp.mean((pooled - mu) ** 2, axis=0, keepdims=True)
    x_bn = ((pooled - mu) * jax.lax.rsqrt(var1 + BN_EPS)
            * params["bn1d_gamma"] + params["bn1d_beta"])
    inv_xn = 1.0 / jnp.maximum(
        jnp.sqrt(jnp.sum(x_bn * x_bn, axis=1, keepdims=True)), NORM_EPS)
    xn_bf16 = (x_bn * inv_xn).astype(jnp.bfloat16)     # unit-norm rows for the MXU

    # Kernel 3: additive-margin cosine head over native (C, D) classifier.
    output = add_margin_head(xn_bf16, params["cls_w"], labels)
    return x_bn, output


# ----------------------------------------------------------------------------
# Deterministic parameter init (mirrors weight_init / xavier_uniform_).
# ----------------------------------------------------------------------------
def init_params(key, cin, dim, num_classes):
    k_conv, k_cls = jax.random.split(key)
    # Conv2d: normal(0, sqrt(2 / (kh*kw*out_channels)))
    fan = 3 * 3 * dim
    conv_w = jax.random.normal(k_conv, (dim, cin, 3, 3), jnp.float32) * math.sqrt(2.0 / fan)
    # BatchNorm(2d/1d): gamma = 1, beta = 0  (kept 2D / lane-dense for the kernels)
    bn2d_gamma = jnp.ones((1, dim), jnp.float32)
    bn2d_beta = jnp.zeros((1, dim), jnp.float32)
    bn1d_gamma = jnp.ones((1, dim), jnp.float32)
    bn1d_beta = jnp.zeros((1, dim), jnp.float32)
    # Classifier weight: xavier_uniform_ over (num_classes, dim); kept native (C, D).
    bound = math.sqrt(6.0 / (num_classes + dim))
    cls_w = jax.random.uniform(k_cls, (num_classes, dim), jnp.float32, -bound, bound)
    return {
        "conv_w": conv_w,
        "bn2d_gamma": bn2d_gamma,
        "bn2d_beta": bn2d_beta,
        "bn1d_gamma": bn1d_gamma,
        "bn1d_beta": bn1d_beta,
        "cls_w": cls_w,
    }


if __name__ == "__main__":
    key = jax.random.PRNGKey(0)
    k_params, k_x, k_lbl = jax.random.split(key, 3)

    # Small synthetic shapes that still exercise every tiling path:
    # M = 4*16*16 = 1024; HW = 256; C = 1024 -> 2 class tiles of 512;
    # D = 128 keeps every block lane-dense.
    N, CIN, H, W = 4, 3, 32, 32
    DIM = 128                         # backbone feature dim (stand-in for 2048)
    NUM_CLASSES = 1024

    params = init_params(k_params, CIN, DIM, NUM_CLASSES)
    x = jax.random.normal(k_x, (N, CIN, H, W), jnp.float32)          # NCHW input
    labels = jax.random.randint(k_lbl, (N,), 0, NUM_CLASSES, jnp.int32)

    fwd = jax.jit(cnn_add_margin_forward)
    x_feat, logits = fwd(x, params, labels)
    jax.block_until_ready((x_feat, logits))

    assert x_feat.shape == (N, DIM)
    assert logits.shape == (N, NUM_CLASSES)
    assert bool(jnp.all(jnp.isfinite(x_feat))) and bool(jnp.all(jnp.isfinite(logits)))
    print("KERNEL_OK")
</pallas_src>

<mosaic_0001>
module attributes {stable_mosaic.version = 11 : i64} {
  func.func @_conv_stats_kernel(%arg0: i32, %arg1: i32, %arg2: memref<512x27xbf16, #tpu.memory_space<vmem>>, %arg3: memref<27x128xbf16, #tpu.memory_space<vmem>>, %arg4: memref<512x128xbf16, #tpu.memory_space<vmem>>, %arg5: memref<1x2x128xf32, #tpu.memory_space<vmem>>) attributes {dimension_semantics = [#tpu.dimension_semantics<parallel>, #tpu.dimension_semantics<arbitrary>], iteration_bounds = array<i64: 2, 1>, scalar_prefetch = 0 : i64, scratch_operands = 0 : i64, tpu.core_type = #tpu.core_type<tc>, window_params = [{transform_indices = @transform_0, window_bounds = array<i64: 512, 27>}, {transform_indices = @transform_1, window_bounds = array<i64: 27, 128>}, {transform_indices = @transform_2, window_bounds = array<i64: 512, 128>}, {transform_indices = @transform_3, window_bounds = array<i64: 1, 2, 128>}]} {
    %c0 = arith.constant 0 : index
    %c0_0 = arith.constant 0 : index
    %0 = vector.load %arg2[%c0, %c0_0] : memref<512x27xbf16, #tpu.memory_space<vmem>>, vector<512x27xbf16>
    %c0_1 = arith.constant 0 : index
    %c0_2 = arith.constant 0 : index
    %1 = vector.load %arg3[%c0_1, %c0_2] : memref<27x128xbf16, #tpu.memory_space<vmem>>, vector<27x128xbf16>
    %cst = arith.constant dense<0.000000e+00> : vector<512x128xf32>
    %2 = tpu.matmul %0, %1, %cst {dimension_numbers = #tpu.dot_dimension_numbers<[1], [0], [0], [1], [0, 0, 1, 1], [], []>} : vector<512x27xbf16>, vector<27x128xbf16>, vector<512x128xf32> -> vector<512x128xf32>
    %3 = arith.truncf %2 : vector<512x128xf32> to vector<512x128xbf16>
    %c0_3 = arith.constant 0 : index
    %c0_4 = arith.constant 0 : index
    %4 = vector.load %arg4[%c0_3, %c0_4] : memref<512x128xbf16, #tpu.memory_space<vmem>>, vector<512x128xbf16>
    tpu.vector_store %arg4[%c0_3, %c0_4], %3 {strides = array<i32>} : memref<512x128xbf16, #tpu.memory_space<vmem>>, vector<512x128xbf16>,
    %cst_5 = arith.constant dense<0.000000e+00> : vector<128xf32>
    %5 = vector.multi_reduction <add>, %2, %cst_5 [0] : vector<512x128xf32> to vector<128xf32>
    %6 = vector.shape_cast %5 : vector<128xf32> to vector<1x128xf32>
    %c0_6 = arith.constant 0 : index
    %c0_7 = arith.constant 0 : index
    %c0_8 = arith.constant 0 : index
    %7 = vector.load %arg5[%c0_6, %c0_7, %c0_8] : memref<1x2x128xf32, #tpu.memory_space<vmem>>, vector<1x1x128xf32>
    %8 = vector.shape_cast %7 : vector<1x1x128xf32> to vector<1x128xf32>
    %9 = vector.shape_cast %6 : vector<1x128xf32> to vector<1x1x128xf32>
    tpu.vector_store %arg5[%c0_6, %c0_7, %c0_8], %9 {strides = array<i32>} : memref<1x2x128xf32, #tpu.memory_space<vmem>>, vector<1x1x128xf32>,
    %10 = arith.mulf %2, %2 : vector<512x128xf32>
    %cst_9 = arith.constant dense<0.000000e+00> : vector<128xf32>
    %11 = vector.multi_reduction <add>, %10, %cst_9 [0] : vector<512x128xf32> to vector<128xf32>
    %12 = vector.shape_cast %11 : vector<128xf32> to vector<1x128xf32>
    %c0_10 = arith.constant 0 : index
    %c1 = arith.constant 1 : index
    %c0_11 = arith.constant 0 : index
    %13 = vector.load %arg5[%c0_10, %c1, %c0_11] : memref<1x2x128xf32, #tpu.memory_space<vmem>>, vector<1x1x128xf32>
    %14 = vector.shape_cast %13 : vector<1x1x128xf32> to vector<1x128xf32>
    %15 = vector.shape_cast %12 : vector<1x128xf32> to vector<1x1x128xf32>
    tpu.vector_store %arg5[%c0_10, %c1, %c0_11], %15 {strides = array<i32>} : memref<1x2x128xf32, #tpu.memory_space<vmem>>, vector<1x1x128xf32>,
    return
  }
  func.func @transform_0(%arg0: i32, %arg1: i32) -> (i32, i32) {
    %c0_i32 = arith.constant 0 : i32
    return %arg0, %arg1 : i32, i32
  }
  func.func @transform_1(%arg0: i32, %arg1: i32) -> (i32, i32) {
    %c0_i32 = arith.constant 0 : i32
    %c0_i32_0 = arith.constant 0 : i32
    return %arg1, %c0_i32 : i32, i32
  }
  func.func @transform_2(%arg0: i32, %arg1: i32) -> (i32, i32) {
    %c0_i32 = arith.constant 0 : i32
    %c0_i32_0 = arith.constant 0 : i32
    return %arg0, %c0_i32 : i32, i32
  }
  func.func @transform_3(%arg0: i32, %arg1: i32) -> (i32, i32, i32) {
    %c0_i32 = arith.constant 0 : i32
    %c0_i32_0 = arith.constant 0 : i32
    %c0_i32_1 = arith.constant 0 : i32
    return %arg0, %c0_i32, %c0_i32_0 : i32, i32, i32
  }
}

module attributes {stable_mosaic.version = 11 : i64} {
  func.func @_bn_relu_pool_kernel(%arg0: i32, %arg1: i32, %arg2: memref<1x256x128xbf16, #tpu.memory_space<vmem>>, %arg3: memref<1x128xf32, #tpu.memory_space<vmem>>, %arg4: memref<1x128xf32, #tpu.memory_space<vmem>>, %arg5: memref<1x1x128xf32, #tpu.memory_space<vmem>>) attributes {dimension_semantics = [#tpu.dimension_semantics<parallel>, #tpu.dimension_semantics<arbitrary>], iteration_bounds = array<i64: 4, 1>, scalar_prefetch = 0 : i64, scratch_operands = 0 : i64, tpu.core_type = #tpu.core_type<tc>, window_params = [{transform_indices = @transform_0, window_bounds = array<i64: 1, 256, 128>}, {pipeline_mode = #tpu.pipeline_mode<synchronous>, transform_indices = @transform_1, window_bounds = array<i64: 1, 128>}, {pipeline_mode = #tpu.pipeline_mode<synchronous>, transform_indices = @transform_2, window_bounds = array<i64: 1, 128>}, {transform_indices = @transform_3, window_bounds = array<i64: 1, 1, 128>}]} {
    %c0 = arith.constant 0 : index
    %c0_0 = arith.constant 0 : index
    %c0_1 = arith.constant 0 : index
    %0 = vector.load %arg2[%c0, %c0_0, %c0_1] : memref<1x256x128xbf16, #tpu.memory_space<vmem>>, vector<1x256x128xbf16>
    %1 = vector.shape_cast %0 : vector<1x256x128xbf16> to vector<256x128xbf16>
    %2 = arith.extf %1 : vector<256x128xbf16> to vector<256x128xf32>
    %c0_2 = arith.constant 0 : index
    %c0_3 = arith.constant 0 : index
    %3 = vector.load %arg3[%c0_2, %c0_3] : memref<1x128xf32, #tpu.memory_space<vmem>>, vector<1x128xf32>
    %4 = vector.broadcast %3 : vector<1x128xf32> to vector<256x128xf32>
    %5 = arith.mulf %2, %4 : vector<256x128xf32>
    %c0_4 = arith.constant 0 : index
    %c0_5 = arith.constant 0 : index
    %6 = vector.load %arg4[%c0_4, %c0_5] : memref<1x128xf32, #tpu.memory_space<vmem>>, vector<1x128xf32>
    %7 = vector.broadcast %6 : vector<1x128xf32> to vector<256x128xf32>
    %8 = arith.addf %5, %7 : vector<256x128xf32>
    %cst = arith.constant 0.000000e+00 : f32
    %9 = vector.broadcast %cst : f32 to vector<256x128xf32>
    %10 = arith.maximumf %8, %9 : vector<256x128xf32>
    %cst_6 = arith.constant dense<0.000000e+00> : vector<128xf32>
    %11 = vector.multi_reduction <add>, %10, %cst_6 [0] : vector<256x128xf32> to vector<128xf32>
    %12 = vector.shape_cast %11 : vector<128xf32> to vector<1x128xf32>
    %c0_i32 = arith.constant 0 : i32
    %13 = arith.cmpi eq, %arg1, %c0_i32 : i32
    %14 = arith.extui %13 : i1 to i32
    %c0_i32_7 = arith.constant 0 : i32
    %15 = arith.cmpi ne, %14, %c0_i32_7 : i32
    scf.if %15 {
      %c0_10 = arith.constant 0 : index
      %c0_11 = arith.constant 0 : index
      %c0_12 = arith.constant 0 : index
      %19 = vector.load %arg5[%c0_10, %c0_11, %c0_12] : memref<1x1x128xf32, #tpu.memory_space<vmem>>, vector<1x1x128xf32>
      %20 = vector.shape_cast %19 : vector<1x1x128xf32> to vector<1x128xf32>
      %21 = vector.shape_cast %12 : vector<1x128xf32> to vector<1x1x128xf32>
      tpu.vector_store %arg5[%c0_10, %c0_11, %c0_12], %21 {strides = array<i32>} : memref<1x1x128xf32, #tpu.memory_space<vmem>>, vector<1x1x128xf32>,
    } else {
    }
    %c0_i32_8 = arith.constant 0 : i32
    %16 = arith.cmpi sgt, %arg1, %c0_i32_8 : i32
    %17 = arith.extui %16 : i1 to i32
    %c0_i32_9 = arith.constant 0 : i32
    %18 = arith.cmpi ne, %17, %c0_i32_9 : i32
    scf.if %18 {
      %c0_10 = arith.constant 0 : index
      %c0_11 = arith.constant 0 : index
      %c0_12 = arith.constant 0 : index
      %19 = vector.load %arg5[%c0_10, %c0_11, %c0_12] : memref<1x1x128xf32, #tpu.memory_space<vmem>>, vector<1x1x128xf32>
      %20 = vector.shape_cast %19 : vector<1x1x128xf32> to vector<1x128xf32>
      %21 = arith.addf %20, %12 : vector<1x128xf32>
      %c0_13 = arith.constant 0 : index
      %c0_14 = arith.constant 0 : index
      %c0_15 = arith.constant 0 : index
      %22 = vector.load %arg5[%c0_13, %c0_14, %c0_15] : memref<1x1x128xf32, #tpu.memory_space<vmem>>, vector<1x1x128xf32>
      %23 = vector.shape_cast %22 : vector<1x1x128xf32> to vector<1x128xf32>
      %24 = vector.shape_cast %21 : vector<1x128xf32> to vector<1x1x128xf32>
      tpu.vector_store %arg5[%c0_13, %c0_14, %c0_15], %24 {strides = array<i32>} : memref<1x1x128xf32, #tpu.memory_space<vmem>>, vector<1x1x128xf32>,
    } else {
    }
    return
  }
  func.func @transform_0(%arg0: i32, %arg1: i32) -> (i32, i32, i32) {
    %c0_i32 = arith.constant 0 : i32
    %c0_i32_0 = arith.constant 0 : i32
    return %arg0, %arg1, %c0_i32 : i32, i32, i32
  }
  func.func @transform_1(%arg0: i32, %arg1: i32) -> (i32, i32) {
    %c0_i32 = arith.constant 0 : i32
    %c0_i32_0 = arith.constant 0 : i32
    %c0_i32_1 = arith.constant 0 : i32
    return %c0_i32, %c0_i32_0 : i32, i32
  }
  func.func @transform_2(%arg0: i32, %arg1: i32) -> (i32, i32) {
    %c0_i32 = arith.constant 0 : i32
    %c0_i32_0 = arith.constant 0 : i32
    %c0_i32_1 = arith.constant 0 : i32
    return %c0_i32, %c0_i32_0 : i32, i32
  }
  func.func @transform_3(%arg0: i32, %arg1: i32) -> (i32, i32, i32) {
    %c0_i32 = arith.constant 0 : i32
    %c0_i32_0 = arith.constant 0 : i32
    %c0_i32_1 = arith.constant 0 : i32
    return %arg0, %c0_i32, %c0_i32_0 : i32, i32, i32
  }
}

module attributes {stable_mosaic.version = 11 : i64} {
  func.func @_add_margin_kernel(%arg0: i32, %arg1: memref<4x128xbf16, #tpu.memory_space<vmem>>, %arg2: memref<512x128xf32, #tpu.memory_space<vmem>>, %arg3: memref<4x1xi32, #tpu.memory_space<vmem>>, %arg4: memref<4x512xf32, #tpu.memory_space<vmem>>) attributes {dimension_semantics = [#tpu.dimension_semantics<parallel>], iteration_bounds = array<i64: 2>, scalar_prefetch = 0 : i64, scratch_operands = 0 : i64, tpu.core_type = #tpu.core_type<tc>, window_params = [{pipeline_mode = #tpu.pipeline_mode<synchronous>, transform_indices = @transform_0, window_bounds = array<i64: 4, 128>}, {transform_indices = @transform_1, window_bounds = array<i64: 512, 128>}, {pipeline_mode = #tpu.pipeline_mode<synchronous>, transform_indices = @transform_2, window_bounds = array<i64: 4, 1>}, {transform_indices = @transform_3, window_bounds = array<i64: 4, 512>}]} {
    %c0 = arith.constant 0 : index
    %c0_0 = arith.constant 0 : index
    %0 = vector.load %arg2[%c0, %c0_0] : memref<512x128xf32, #tpu.memory_space<vmem>>, vector<512x128xf32>
    %1 = arith.mulf %0, %0 : vector<512x128xf32>
    %cst = arith.constant dense<0.000000e+00> : vector<512xf32>
    %2 = vector.multi_reduction <add>, %1, %cst [1] : vector<512x128xf32> to vector<512xf32>
    %3 = vector.shape_cast %2 : vector<512xf32> to vector<512x1xf32>
    %cst_1 = arith.constant 1.000000e-24 : f32
    %4 = vector.broadcast %cst_1 : f32 to vector<512x1xf32>
    %5 = arith.maximumf %3, %4 : vector<512x1xf32>
    %6 = math.rsqrt %5 : vector<512x1xf32>
    %7 = vector.broadcast %6 : vector<512x1xf32> to vector<512x128xf32>
    %8 = arith.mulf %0, %7 : vector<512x128xf32>
    %9 = arith.truncf %8 : vector<512x128xf32> to vector<512x128xbf16>
    %c0_2 = arith.constant 0 : index
    %c0_3 = arith.constant 0 : index
    %10 = vector.load %arg1[%c0_2, %c0_3] : memref<4x128xbf16, #tpu.memory_space<vmem>>, vector<4x128xbf16>
    %cst_4 = arith.constant dense<0.000000e+00> : vector<4x512xf32>
    %11 = tpu.matmul %10, %9, %cst_4 {dimension_numbers = #tpu.dot_dimension_numbers<[1], [1], [0], [0], [0, 0, 1, 0], [], []>} : vector<4x128xbf16>, vector<512x128xbf16>, vector<4x512xf32> -> vector<4x512xf32>
    %12 = tpu.iota {dimensions = array<i32: 1>} : vector<4x512xi32>
    %c512_i32 = arith.constant 512 : i32
    %13 = arith.muli %arg0, %c512_i32 : i32
    %14 = vector.broadcast %13 : i32 to vector<4x512xi32>
    %15 = arith.addi %12, %14 : vector<4x512xi32>
    %c0_5 = arith.constant 0 : index
    %c0_6 = arith.constant 0 : index
    %16 = vector.load %arg3[%c0_5, %c0_6] : memref<4x1xi32, #tpu.memory_space<vmem>>, vector<4x1xi32>
    %17 = vector.broadcast %16 : vector<4x1xi32> to vector<4x512xi32>
    %18 = arith.cmpi eq, %15, %17 : vector<4x512xi32>
    %cst_7 = arith.constant 2.500000e-01 : f32
    %19 = vector.broadcast %cst_7 : f32 to vector<4x512xf32>
    %20 = arith.subf %11, %19 : vector<4x512xf32>
    %21 = arith.select %18, %20, %11 : vector<4x512xi1>, vector<4x512xf32>
    %cst_8 = arith.constant 7.000000e+01 : f32
    %22 = vector.broadcast %cst_8 : f32 to vector<4x512xf32>
    %23 = arith.mulf %21, %22 : vector<4x512xf32>
    %c0_9 = arith.constant 0 : index
    %c0_10 = arith.constant 0 : index
    %24 = vector.load %arg4[%c0_9, %c0_10] : memref<4x512xf32, #tpu.memory_space<vmem>>, vector<4x512xf32>
    tpu.vector_store %arg4[%c0_9, %c0_10], %23 {strides = array<i32>} : memref<4x512xf32, #tpu.memory_space<vmem>>, vector<4x512xf32>,
    return
  }
  func.func @transform_0(%arg0: i32) -> (i32, i32) {
    %c0_i32 = arith.constant 0 : i32
    %c0_i32_0 = arith.constant 0 : i32
    %c0_i32_1 = arith.constant 0 : i32
    return %c0_i32, %c0_i32_0 : i32, i32
  }
  func.func @transform_1(%arg0: i32) -> (i32, i32) {
    %c0_i32 = arith.constant 0 : i32
    %c0_i32_0 = arith.constant 0 : i32
    return %arg0, %c0_i32 : i32, i32
  }
  func.func @transform_2(%arg0: i32) -> (i32, i32) {
    %c0_i32 = arith.constant 0 : i32
    %c0_i32_0 = arith.constant 0 : i32
    %c0_i32_1 = arith.constant 0 : i32
    return %c0_i32, %c0_i32_0 : i32, i32
  }
  func.func @transform_3(%arg0: i32) -> (i32, i32) {
    %c0_i32 = arith.constant 0 : i32
    %c0_i32_0 = arith.constant 0 : i32
    return %c0_i32, %arg0 : i32, i32
  }
}

</mosaic_0001>

<llo_original>
// kernel: cnn_add_margin_forward.4
$region0: #{cnn_add_margin_forward.4}
  #allocation0 [shape = 'u32[]', space=smem, size = 0x4, offset = 0x4, fixed_abs, tag = 'smem constant byte address 0x4 - core index']
  #allocation1 [shape = 'u32[144,128]{1,0:T(1,128)}', space=vmem, size = 0x12000, scoped, tag = 'internal scratch']
  %s0 = inlined_call_operand.vmem [shape: bf16[4,256,128], index: 0, kind: input, shape index: {}]
  %s1 = inlined_call_operand.vmem [shape: f32[1,128], index: 1, kind: input, shape index: {}]
  %s2 = inlined_call_operand.vmem [shape: f32[1,128], index: 2, kind: input, shape index: {}]
  %s3 = inlined_call_operand.vmem [shape: f32[4,1,128], index: 3, kind: output, shape index: {}]
  %s4 = sld [smem:[#allocation0]]
  $region53: #{cnn_add_margin_forward.4} parent=0
    _
  %s6 = ssub.s32 1, %s4
  %s7 = scalar_select 0, %s6, %s4
  loop: start=0, step=1, limit=6
  $region2: #{cnn_add_margin_forward.4} parent=0 // loop_pre_header
    _
  $region3: #{cnn_add_margin_forward.4} parent=0 // loop_header
    %s9 = sphi 0, %s13
    %p10 = scmp.ge.s32.totalorder %s9, 6
    %s16 = sphi 0, %s28
    %s17 = sphi 0, %s24
    %s18 = sphi 0, %s16
    %s19 = sphi 0, %s17
    %s20 = sphi 0, %s18
    %s21 = sphi 0, %s19
    %s33 = sphi 0, %s35
    %s36 = sphi 0, %s33
    %s37 = sphi 0, %s36
    %s53 = sphi 0, %s37
    %s57 = sphi 0, %s57
    %s59 = sphi 0, %s57
    %s60 = sphi 0, %s59
    %s74 = sphi 0, %s60
    %s78 = sphi 0, %s78
    %s80 = sphi 0, %s78
    %s81 = sphi 0, %s80
    %s95 = sphi 0, %s81
    %s101 = sphi 0, %s103
    %s104 = sphi 0, %s101
    %s105 = sphi 0, %s104
    %s121 = sphi 0, %s105
  $region4: #{cnn_add_margin_forward.4} parent=0 // loop_header_branch
    %12 = sbr.rel (%p10) target = $region8
  $region5: #{cnn_add_margin_forward.4} parent=0 // loop_body
    %s14 = ssub.s32 %s9, 1
    %s15 = ssub.s32 %s9, 2
    %s22 = sadd.s32 1, %s17
    %p23 = scmp.ge.s32.totalorder %s22, 1
    %s24 = scalar_select %p23, 0, %s22
    %s25 = sadd.s32 1, %s16
    %s26 = scalar_select %p23, %s25, %s16
    %p27 = scmp.ge.s32.totalorder %s26, 4
    %s28 = scalar_select %p27, 0, %s26
    %s29 = ssub.s32 %s16, %s28
    %s30 = ssub.s32 %s17, %s24
    %s31 = sor.u32 %s29, %s30
    %p32 = scmp.eq.s32.totalorder %s31, 0
    %s34 = sadd.s32 %s33, 1
    %s35 = scalar_select %p32, %s33, %s34
    %p38 = pneg %p32
    %p39 = scmp.eq.s32.totalorder %s9, 3
    %p40 = por %p38, %p39
    %p41 = scmp.ne.s32.totalorder %s33, %s36
    %p42 = scmp.eq.s32.totalorder %s9, 0
    %p43 = por %p41, %p42
    %p44 = scmp.ne.s32.totalorder %s33, %s36
    %p45 = scmp.eq.s32.totalorder %s14, 3
    %p46 = por %p44, %p45
    %p47 = scmp.ne.s32.totalorder %s36, %s37
    %p48 = scmp.eq.s32.totalorder %s14, 0
    %p49 = por %p47, %p48
    %p50 = scmp.ne.s32.totalorder %s36, %s37
    %p51 = scmp.eq.s32.totalorder %s15, 3
    %p52 = por %p50, %p51
    %p54 = scmp.ne.s32.totalorder %s37, %s53
    %p55 = scmp.eq.s32.totalorder %s15, 0
    %p56 = por %p54, %p55
    %s58 = sadd.s32 %s57, 1
    %p61 = scmp.eq.s32.totalorder %s9, 3
    %p62 = scmp.ne.s32.totalorder %s57, %s59
    %p63 = scmp.eq.s32.totalorder %s9, 0
    %p64 = por %p62, %p63
    %p65 = scmp.ne.s32.totalorder %s57, %s59
    %p66 = scmp.eq.s32.totalorder %s14, 3
    %p67 = por %p65, %p66
    %p68 = scmp.ne.s32.totalorder %s59, %s60
    %p69 = scmp.eq.s32.totalorder %s14, 0
    %p70 = por %p68, %p69
    %p71 = scmp.ne.s32.totalorder %s59, %s60
    %p72 = scmp.eq.s32.totalorder %s15, 3
    %p73 = por %p71, %p72
    %p75 = scmp.ne.s32.totalorder %s60, %s74
    %p76 = scmp.eq.s32.totalorder %s15, 0
    %p77 = por %p75, %p76
    %s79 = sadd.s32 %s78, 1
    %p82 = scmp.eq.s32.totalorder %s9, 3
    %p83 = scmp.ne.s32.totalorder %s78, %s80
    %p84 = scmp.eq.s32.totalorder %s9, 0
    %p85 = por %p83, %p84
    %p86 = scmp.ne.s32.totalorder %s78, %s80
    %p87 = scmp.eq.s32.totalorder %s14, 3
    %p88 = por %p86, %p87
    %p89 = scmp.ne.s32.totalorder %s80, %s81
    %p90 = scmp.eq.s32.totalorder %s14, 0
    %p91 = por %p89, %p90
    %p92 = scmp.ne.s32.totalorder %s80, %s81
    %p93 = scmp.eq.s32.totalorder %s15, 3
    %p94 = por %p92, %p93
    %p96 = scmp.ne.s32.totalorder %s81, %s95
    %p97 = scmp.eq.s32.totalorder %s15, 0
    %p98 = por %p96, %p97
    %s99 = ssub.s32 %s16, %s28
    %p100 = scmp.eq.s32.totalorder %s99, 0
    %s102 = sadd.s32 %s101, 1
    %s103 = scalar_select %p100, %s101, %s102
    %p106 = pneg %p100
    %p107 = scmp.eq.s32.totalorder %s9, 3
    %p108 = por %p106, %p107
    %p109 = scmp.ne.s32.totalorder %s101, %s104
    %p110 = scmp.eq.s32.totalorder %s9, 0
    %p111 = por %p109, %p110
    %p112 = scmp.ne.s32.totalorder %s101, %s104
    %p113 = scmp.eq.s32.totalorder %s14, 3
    %p114 = por %p112, %p113
    %p115 = scmp.ne.s32.totalorder %s104, %s105
    %p116 = scmp.eq.s32.totalorder %s14, 0
    %p117 = por %p115, %p116
    %p118 = scmp.ne.s32.totalorder %s104, %s105
    %p119 = scmp.eq.s32.totalorder %s15, 3
    %p120 = por %p118, %p119
    %p122 = scmp.ne.s32.totalorder %s105, %s121
    %p123 = scmp.eq.s32.totalorder %s15, 0
    %p124 = por %p122, %p123
    %p125 = scmp.le.s32.totalorder 1, %s9
    %p126 = scmp.lt.s32.totalorder %s9, 5
    %p127 = pnand %p125, %p126
    %p128 = pneg %p127
    // Predicated region
    $region9: #{cnn_add_margin_forward.4} parent=5 // pred_check
      _
    $region10: #{cnn_add_margin_forward.4} parent=5 // pred_check_branch
      %130 = sbr.rel (%p127) target = $region12
    $region11: #{cnn_add_margin_forward.4} parent=5 // pred_region
      %s131 = ssub.s32 %s9, 1
      // Predicated region
      $region13: #{cnn_add_margin_forward.4} parent=11 // pred_check
        %p132 = pneg %p70
      $region14: #{cnn_add_margin_forward.4} parent=11 // pred_check_branch
        %134 = sbr.rel (%p132) target = $region16
      $region15: #{cnn_add_margin_forward.4} parent=11 // pred_region
        _
      $region16: #{cnn_add_margin_forward.4} parent=11 // pred_fallthru
        _
      // Predicated region
      $region17: #{cnn_add_margin_forward.4} parent=11 // pred_check
        %p135 = pneg %p91
      $region18: #{cnn_add_margin_forward.4} parent=11 // pred_check_branch
        %137 = sbr.rel (%p135) target = $region20
      $region19: #{cnn_add_margin_forward.4} parent=11 // pred_region
        _
      $region20: #{cnn_add_margin_forward.4} parent=11 // pred_fallthru
        _
    $region12: #{cnn_add_margin_forward.4} parent=5 // pred_fallthru
      _
    %p138 = scmp.lt.s32.totalorder %s9, 4
    // Predicated region
    $region21: #{cnn_add_margin_forward.4} parent=5 // pred_check
      %p139 = pneg %p138
    $region22: #{cnn_add_margin_forward.4} parent=5 // pred_check_branch
      %141 = sbr.rel (%p139) target = $region24
    $region23: #{cnn_add_margin_forward.4} parent=5 // pred_region
      // Predicated region
      $region25: #{cnn_add_margin_forward.4} parent=23 // pred_check
        %p142 = pneg %p43
      $region26: #{cnn_add_margin_forward.4} parent=23 // pred_check_branch
        %144 = sbr.rel (%p142) target = $region28
      $region27: #{cnn_add_margin_forward.4} parent=23 // pred_region
        %s145 = smul.u32 32, %s17
        %p146 = scmp.lt.s32.totalorder %s16, 3
        %s147 = scalar_select %p146, %s16, 3
        %p148 = scmp.lt.s32.totalorder %s145, 31
        %s149 = scalar_select %p148, %s145, 31
        %s150 = smul.addr %s147, 32
        %s151 = sadd.s32 %s149, %s150
        %s152 = smul.addr %s151, 4
        %s153 = scalar_lea.vmem %s0, %s152
        %s154 = smul.u32 32, %s17
      $region28: #{cnn_add_margin_forward.4} parent=23 // pred_fallthru
        _
    $region24: #{cnn_add_margin_forward.4} parent=5 // pred_fallthru
      _
    %p155 = scmp.le.s32.totalorder 1, %s9
    %p156 = scmp.lt.s32.totalorder %s9, 5
    %p157 = pnand %p155, %p156
    %p158 = pneg %p157
    // Predicated region
    $region29: #{cnn_add_margin_forward.4} parent=5 // pred_check
      _
    $region30: #{cnn_add_margin_forward.4} parent=5 // pred_check_branch
      %160 = sbr.rel (%p157) target = $region32
    $region31: #{cnn_add_margin_forward.4} parent=5 // pred_region
      %s161 = ssub.s32 %s9, 1
      %s162 = smul.u32 32, %s19
      %p163 = scmp.lt.s32.totalorder %s18, 3
      %s164 = scalar_select %p163, %s18, 3
      %p165 = scmp.lt.s32.totalorder %s162, 31
      %s166 = scalar_select %p165, %s162, 31
      %s167 = smul.addr %s164, 32
      %s168 = sadd.s32 %s166, %s167
      %s169 = smul.addr %s168, 4
      %s170 = scalar_lea.vmem %s0, %s169
      %p171 = pneg %p49
      %p172 = pneg %p46
      %p173 = pneg %p70
      %p174 = pneg %p67
      %p175 = pneg %p91
      %p176 = pneg %p88
      %p177 = pneg %p117
      %p178 = pneg %p114
      %p179 = scmp.lt.s32.totalorder %s18, 3
      %s180 = scalar_select %p179, %s18, 3
      %s181 = scalar_lea.vmem %s3, %s180
      %s182 = smul.u32 32, %s19
      %p183 = scmp.lt.s32.totalorder %s18, 3
      %s184 = scalar_select %p183, %s18, 3
      %p185 = scmp.lt.s32.totalorder %s182, 31
      %s186 = scalar_select %p185, %s182, 31
      %s187 = smul.addr %s184, 32
      %s188 = sadd.s32 %s186, %s187
      %s189 = smul.addr %s188, 4
      %s190 = scalar_lea.vmem %s0, %s189
      %s191 = smul.u32 32, %s19
      %p192 = scmp.lt.s32.totalorder %s18, 3
      %s193 = scalar_select %p192, %s18, 3
      %s194 = scalar_lea.vmem %s3, %s193
      %v195 = vld [vmem:[%s190] sm:$0xf]
      %v196 = vld [vmem:[%s190 + $0x4] sm:$0xf]
      %v197 = vld [vmem:[%s190 + $0x8] sm:$0xf]
      %v198 = vld [vmem:[%s190 + $0xc] sm:$0xf]
      %v199 = vld [vmem:[%s190 + $0x10] sm:$0xf]
      %v200 = vld [vmem:[%s190 + $0x14] sm:$0xf]
      %v201 = vld [vmem:[%s190 + $0x18] sm:$0xf]
      %v202 = vld [vmem:[%s190 + $0x1c] sm:$0xf]
      %v203 = vld [vmem:[%s190 + $0x20] sm:$0xf]
      %v204 = vld [vmem:[%s190 + $0x24] sm:$0xf]
      %v205 = vld [vmem:[%s190 + $0x28] sm:$0xf]
      %v206 = vld [vmem:[%s190 + $0x2c] sm:$0xf]
      %v207 = vld [vmem:[%s190 + $0x30] sm:$0xf]
      %v208 = vld [vmem:[%s190 + $0x34] sm:$0xf]
      %v209 = vld [vmem:[%s190 + $0x38] sm:$0xf]
      %v210 = vld [vmem:[%s190 + $0x3c] sm:$0xf]
      %v211 = vld [vmem:[%s190 + $0x40] sm:$0xf]
      %v212 = vld [vmem:[%s190 + $0x44] sm:$0xf]
      %v213 = vld [vmem:[%s190 + $0x48] sm:$0xf]
      %v214 = vld [vmem:[%s190 + $0x4c] sm:$0xf]
      %v215 = vld [vmem:[%s190 + $0x50] sm:$0xf]
      %v216 = vld [vmem:[%s190 + $0x54] sm:$0xf]
      %v217 = vld [vmem:[%s190 + $0x58] sm:$0xf]
      %v218 = vld [vmem:[%s190 + $0x5c] sm:$0xf]
      %v219 = vld [vmem:[%s190 + $0x60] sm:$0xf]
      %v220 = vld [vmem:[%s190 + $0x64] sm:$0xf]
      %v221 = vld [vmem:[%s190 + $0x68] sm:$0xf]
      %v222 = vld [vmem:[%s190 + $0x6c] sm:$0xf]
      %v223 = vld [vmem:[%s190 + $0x70] sm:$0xf]
      %v224 = vld [vmem:[%s190 + $0x74] sm:$0xf]
      %v225 = vld [vmem:[%s190 + $0x78] sm:$0xf]
      %v226 = vld [vmem:[%s190 + $0x7c] sm:$0xf]
      %v227 = vunpack.c.l.bf16 %v195
      %v228 = vunpack.c.l.bf16 %v196
      %v229 = vunpack.c.l.bf16 %v197
      %v230 = vunpack.c.l.bf16 %v198
      %v231 = vunpack.c.l.bf16 %v199
      %v232 = vunpack.c.l.bf16 %v200
      %v233 = vunpack.c.l.bf16 %v201
      %v234 = vunpack.c.l.bf16 %v202
      %v235 = vunpack.c.l.bf16 %v203
      %v236 = vunpack.c.l.bf16 %v204
      %v237 = vunpack.c.l.bf16 %v205
      %v238 = vunpack.c.l.bf16 %v206
      %v239 = vunpack.c.l.bf16 %v207
      %v240 = vunpack.c.l.bf16 %v208
      %v241 = vunpack.c.l.bf16 %v209
      %v242 = vunpack.c.l.bf16 %v210
      %v243 = vunpack.c.l.bf16 %v211
      %v244 = vunpack.c.l.bf16 %v212
      %v245 = vunpack.c.l.bf16 %v213
      %v246 = vunpack.c.l.bf16 %v214
      %v247 = vunpack.c.l.bf16 %v215
      %v248 = vunpack.c.l.bf16 %v216
      %v249 = vunpack.c.l.bf16 %v217
      %v250 = vunpack.c.l.bf16 %v218
      %v251 = vunpack.c.l.bf16 %v219
      %v252 = vunpack.c.l.bf16 %v220
      %v253 = vunpack.c.l.bf16 %v221
      %v254 = vunpack.c.l.bf16 %v222
      %v255 = vunpack.c.l.bf16 %v223
      %v256 = vunpack.c.l.bf16 %v224
      %v257 = vunpack.c.l.bf16 %v225
      %v258 = vunpack.c.l.bf16 %v226
      %v259 = vld [vmem:[%s1] sm:$0x1]
      %v261 = vlaneseq
      %v262 = vshrl.u32 %v261, 7
      %v263 = vsub.s32 0, %v262
      %v264 = vrot.slane %v259, %v263
      %v266 = vmul.f32 %v227, %v264
      %v267 = vmul.f32 %v228, %v264
      %v268 = vmul.f32 %v229, %v264
      %v269 = vmul.f32 %v230, %v264
      %v270 = vmul.f32 %v231, %v264
      %v271 = vmul.f32 %v232, %v264
      %v272 = vmul.f32 %v233, %v264
      %v273 = vmul.f32 %v234, %v264
      %v274 = vmul.f32 %v235, %v264
      %v275 = vmul.f32 %v236, %v264
      %v276 = vmul.f32 %v237, %v264
      %v277 = vmul.f32 %v238, %v264
      %v278 = vmul.f32 %v239, %v264
      %v279 = vmul.f32 %v240, %v264
      %v280 = vmul.f32 %v241, %v264
      %v281 = vmul.f32 %v242, %v264
      %v282 = vmul.f32 %v243, %v264
      %v283 = vmul.f32 %v244, %v264
      %v284 = vmul.f32 %v245, %v264
      %v285 = vmul.f32 %v246, %v264
      %v286 = vmul.f32 %v247, %v264
      %v287 = vmul.f32 %v248, %v264
      %v288 = vmul.f32 %v249, %v264
      %v289 = vmul.f32 %v250, %v264
      %v290 = vmul.f32 %v251, %v264
      %v291 = vmul.f32 %v252, %v264
      %v292 = vmul.f32 %v253, %v264
      %v293 = vmul.f32 %v254, %v264
      %v294 = vmul.f32 %v255, %v264
      %v295 = vmul.f32 %v256, %v264
      %v296 = vmul.f32 %v257, %v264
      %v297 = vmul.f32 %v258, %v264
      %v298 = vld [vmem:[%s2] sm:$0x1]
      %v300 = vlaneseq
      %v301 = vshrl.u32 %v300, 7
      %v302 = vsub.s32 0, %v301
      %v303 = vrot.slane %v298, %v302
      %v305 = vadd.f32 %v266, %v303
      %v306 = vadd.f32 %v267, %v303
      %v307 = vadd.f32 %v268, %v303
      %v308 = vadd.f32 %v269, %v303
      %v309 = vadd.f32 %v270, %v303
      %v310 = vadd.f32 %v271, %v303
      %v311 = vadd.f32 %v272, %v303
      %v312 = vadd.f32 %v273, %v303
      %v313 = vadd.f32 %v274, %v303
      %v314 = vadd.f32 %v275, %v303
      %v315 = vadd.f32 %v276, %v303
      %v316 = vadd.f32 %v277, %v303
      %v317 = vadd.f32 %v278, %v303
      %v318 = vadd.f32 %v279, %v303
      %v319 = vadd.f32 %v280, %v303
      %v320 = vadd.f32 %v281, %v303
      %v321 = vadd.f32 %v282, %v303
      %v322 = vadd.f32 %v283, %v303
      %v323 = vadd.f32 %v284, %v303
      %v324 = vadd.f32 %v285, %v303
      %v325 = vadd.f32 %v286, %v303
      %v326 = vadd.f32 %v287, %v303
      %v327 = vadd.f32 %v288, %v303
      %v328 = vadd.f32 %v289, %v303
      %v329 = vadd.f32 %v290, %v303
      %v330 = vadd.f32 %v291, %v303
      %v331 = vadd.f32 %v292, %v303
      %v332 = vadd.f32 %v293, %v303
      %v333 = vadd.f32 %v294, %v303
      %v334 = vadd.f32 %v295, %v303
      %v335 = vadd.f32 %v296, %v303
      %v336 = vadd.f32 %v297, %v303
      %v337 = vmax.f32 %v305, 0.0
      %v338 = vmax.f32 %v306, 0.0
      %v339 = vmax.f32 %v307, 0.0
      %v340 = vmax.f32 %v308, 0.0
      %v341 = vmax.f32 %v309, 0.0
      %v342 = vmax.f32 %v310, 0.0
      %v343 = vmax.f32 %v311, 0.0
      %v344 = vmax.f32 %v312, 0.0
      %v345 = vmax.f32 %v313, 0.0
      %v346 = vmax.f32 %v314, 0.0
      %v347 = vmax.f32 %v315, 0.0
      %v348 = vmax.f32 %v316, 0.0
      %v349 = vmax.f32 %v317, 0.0
      %v350 = vmax.f32 %v318, 0.0
      %v351 = vmax.f32 %v319, 0.0
      %v352 = vmax.f32 %v320, 0.0
      %v353 = vmax.f32 %v321, 0.0
      %v354 = vmax.f32 %v322, 0.0
      %v355 = vmax.f32 %v323, 0.0
      %v356 = vmax.f32 %v324, 0.0
      %v357 = vmax.f32 %v325, 0.0
      %v358 = vmax.f32 %v326, 0.0
      %v359 = vmax.f32 %v327, 0.0
      %v360 = vmax.f32 %v328, 0.0
      %v361 = vmax.f32 %v329, 0.0
      %v362 = vmax.f32 %v330, 0.0
      %v363 = vmax.f32 %v331, 0.0
      %v364 = vmax.f32 %v332, 0.0
      %v365 = vmax.f32 %v333, 0.0
      %v366 = vmax.f32 %v334, 0.0
      %v367 = vmax.f32 %v335, 0.0
      %v368 = vmax.f32 %v336, 0.0
      %v369 = vadd.f32 %v337, %v338
      %v370 = vadd.f32 %v369, %v339
      %v371 = vadd.f32 %v370, %v340
      %v372 = vadd.f32 %v371, %v341
      %v373 = vadd.f32 %v372, %v342
      %v374 = vadd.f32 %v373, %v343
      %v375 = vadd.f32 %v374, %v344
      %v376 = vadd.f32 %v375, %v345
      %v377 = vadd.f32 %v376, %v346
      %v378 = vadd.f32 %v377, %v347
      %v379 = vadd.f32 %v378, %v348
      %v380 = vadd.f32 %v379, %v349
      %v381 = vadd.f32 %v380, %v350
      %v382 = vadd.f32 %v381, %v351
      %v383 = vadd.f32 %v382, %v352
      %v384 = vadd.f32 %v383, %v353
      %v385 = vadd.f32 %v384, %v354
      %v386 = vadd.f32 %v385, %v355
      %v387 = vadd.f32 %v386, %v356
      %v388 = vadd.f32 %v387, %v357
      %v389 = vadd.f32 %v388, %v358
      %v390 = vadd.f32 %v389, %v359
      %v391 = vadd.f32 %v390, %v360
      %v392 = vadd.f32 %v391, %v361
      %v393 = vadd.f32 %v392, %v362
      %v394 = vadd.f32 %v393, %v363
      %v395 = vadd.f32 %v394, %v364
      %v396 = vadd.f32 %v395, %v365
      %v397 = vadd.f32 %v396, %v366
      %v398 = vadd.f32 %v397, %v367
      %v399 = vadd.f32 %v398, %v368
      %v400 = vrot.slane %v399, 4
      %v401 = vadd.f32 %v399, %v400
      %v402 = vrot.slane %v401, 2
      %v403 = vadd.f32 %v401, %v402
      %v404 = vrot.slane %v403, 1
      %v405 = vadd.f32 %v403, %v404
      %p406 = scmp.eq.s32.totalorder %s19, 0
      // Predicated region
      $region33: #{cnn_add_margin_forward.4} parent=31 // pred_check
        %p407 = pneg %p406
      $region34: #{cnn_add_margin_forward.4} parent=31 // pred_check_branch
        %409 = sbr.rel (%p407) target = $region36
      $region35: #{cnn_add_margin_forward.4} parent=31 // pred_region
        %410 = vst [vmem:[%s194] sm:$0x1] %v405
      $region36: #{cnn_add_margin_forward.4} parent=31 // pred_fallthru
        _
      %p411 = scmp.gt.s32.totalorder %s19, 0
      // Predicated region
      $region37: #{cnn_add_margin_forward.4} parent=31 // pred_check
        %p412 = pneg %p411
      $region38: #{cnn_add_margin_forward.4} parent=31 // pred_check_branch
        %414 = sbr.rel (%p412) target = $region40
      $region39: #{cnn_add_margin_forward.4} parent=31 // pred_region
        %v415 = vld [vmem:[%s194] sm:$0x1]
        %v416 = vadd.f32 %v415, %v405
        %417 = vst [vmem:[%s194] sm:$0x1] %v416
      $region40: #{cnn_add_margin_forward.4} parent=31 // pred_fallthru
        _
      %p418 = scmp.lt.s32.totalorder %s18, 3
      %s419 = scalar_select %p418, %s18, 3
      %s420 = scalar_lea.vmem %s3, %s419
      // Predicated region
      $region41: #{cnn_add_margin_forward.4} parent=31 // pred_check
        %p421 = pneg %p114
      $region42: #{cnn_add_margin_forward.4} parent=31 // pred_check_branch
        %423 = sbr.rel (%p421) target = $region44
      $region43: #{cnn_add_margin_forward.4} parent=31 // pred_region
        _
      $region44: #{cnn_add_margin_forward.4} parent=31 // pred_fallthru
        _
    $region32: #{cnn_add_margin_forward.4} parent=5 // pred_fallthru
      _
    %p424 = scmp.le.s32.totalorder 2, %s9
    // Predicated region
    $region45: #{cnn_add_margin_forward.4} parent=5 // pred_check
      %p425 = pneg %p424
    $region46: #{cnn_add_margin_forward.4} parent=5 // pred_check_branch
      %427 = sbr.rel (%p425) target = $region48
    $region47: #{cnn_add_margin_forward.4} parent=5 // pred_region
      %s428 = ssub.s32 %s9, 2
      // Predicated region
      $region49: #{cnn_add_margin_forward.4} parent=47 // pred_check
        %p429 = pneg %p120
      $region50: #{cnn_add_margin_forward.4} parent=47 // pred_check_branch
        %431 = sbr.rel (%p429) target = $region52
      $region51: #{cnn_add_margin_forward.4} parent=47 // pred_region
        %p432 = scmp.lt.s32.totalorder %s20, 3
        %s433 = scalar_select %p432, %s20, 3
        %s434 = scalar_lea.vmem %s3, %s433
      $region52: #{cnn_add_margin_forward.4} parent=47 // pred_fallthru
        _
    $region48: #{cnn_add_margin_forward.4} parent=5 // pred_fallthru
      _
  $region6: #{cnn_add_margin_forward.4} parent=0 // loop_footer
    %s13 = sadd.s32 1, %s9
  $region7: #{cnn_add_margin_forward.4} parent=0 // loop_footer_branch
    %8 = sbr.rel target = $region3
  $region8: #{cnn_add_margin_forward.4} parent=0 // loop_exit
    _

// kernel: cnn_add_margin_forward.3
$region0: #{cnn_add_margin_forward.3}
  #allocation0 [shape = 'u32[]', space=smem, size = 0x4, offset = 0x4, fixed_abs, tag = 'smem constant byte address 0x4 - core index']
  #allocation1 [shape = 'u32[144,128]{1,0:T(1,128)}', space=vmem, size = 0x12000, scoped, tag = 'internal scratch']
  %s0 = inlined_call_operand.vmem [shape: bf16[1024,27], index: 0, kind: input, shape index: {}]
  %s1 = inlined_call_operand.vmem [shape: bf16[27,128], index: 1, kind: input, shape index: {}]
  %s2 = inlined_call_operand.vmem [shape: bf16[1024,128], index: 2, kind: output, shape index: {0}]
  %s3 = inlined_call_operand.vmem [shape: f32[2,2,128], index: 3, kind: output, shape index: {1}]
  %4 = xla_tuple %s2, %s3
  %s5 = sld [smem:[#allocation0]]
  $region49: #{cnn_add_margin_forward.3} parent=0
    _
  %s7 = ssub.s32 1, %s5
  %s8 = scalar_select 0, %s7, %s5
  loop: start=0, step=1, limit=4
  $region2: #{cnn_add_margin_forward.3} parent=0 // loop_pre_header
    _
  $region3: #{cnn_add_margin_forward.3} parent=0 // loop_header
    %s10 = sphi 0, %s14
    %p11 = scmp.ge.s32.totalorder %s10, 4
    %s17 = sphi 0, %s29
    %s18 = sphi 0, %s25
    %s19 = sphi 0, %s17
    %s20 = sphi 0, %s18
    %s21 = sphi 0, %s19
    %s22 = sphi 0, %s20
    %s34 = sphi 0, %s36
    %s37 = sphi 0, %s34
    %s38 = sphi 0, %s37
    %s54 = sphi 0, %s38
    %s60 = sphi 0, %s62
    %s63 = sphi 0, %s60
    %s64 = sphi 0, %s63
    %s80 = sphi 0, %s64
    %s86 = sphi 0, %s88
    %s89 = sphi 0, %s86
    %s90 = sphi 0, %s89
    %s106 = sphi 0, %s90
    %s112 = sphi 0, %s114
    %s115 = sphi 0, %s112
    %s116 = sphi 0, %s115
    %s132 = sphi 0, %s116
  $region4: #{cnn_add_margin_forward.3} parent=0 // loop_header_branch
    %13 = sbr.rel (%p11) target = $region8
  $region5: #{cnn_add_margin_forward.3} parent=0 // loop_body
    %s15 = ssub.s32 %s10, 1
    %s16 = ssub.s32 %s10, 2
    %s23 = sadd.s32 1, %s18
    %p24 = scmp.ge.s32.totalorder %s23, 1
    %s25 = scalar_select %p24, 0, %s23
    %s26 = sadd.s32 1, %s17
    %s27 = scalar_select %p24, %s26, %s17
    %p28 = scmp.ge.s32.totalorder %s27, 2
    %s29 = scalar_select %p28, 0, %s27
    %s30 = ssub.s32 %s17, %s29
    %s31 = ssub.s32 %s18, %s25
    %s32 = sor.u32 %s30, %s31
    %p33 = scmp.eq.s32.totalorder %s32, 0
    %s35 = sadd.s32 %s34, 1
    %s36 = scalar_select %p33, %s34, %s35
    %p39 = pneg %p33
    %p40 = scmp.eq.s32.totalorder %s10, 1
    %p41 = por %p39, %p40
    %p42 = scmp.ne.s32.totalorder %s34, %s37
    %p43 = scmp.eq.s32.totalorder %s10, 0
    %p44 = por %p42, %p43
    %p45 = scmp.ne.s32.totalorder %s34, %s37
    %p46 = scmp.eq.s32.totalorder %s15, 1
    %p47 = por %p45, %p46
    %p48 = scmp.ne.s32.totalorder %s37, %s38
    %p49 = scmp.eq.s32.totalorder %s15, 0
    %p50 = por %p48, %p49
    %p51 = scmp.ne.s32.totalorder %s37, %s38
    %p52 = scmp.eq.s32.totalorder %s16, 1
    %p53 = por %p51, %p52
    %p55 = scmp.ne.s32.totalorder %s38, %s54
    %p56 = scmp.eq.s32.totalorder %s16, 0
    %p57 = por %p55, %p56
    %s58 = ssub.s32 %s18, %s25
    %p59 = scmp.eq.s32.totalorder %s58, 0
    %s61 = sadd.s32 %s60, 1
    %s62 = scalar_select %p59, %s60, %s61
    %p65 = pneg %p59
    %p66 = scmp.eq.s32.totalorder %s10, 1
    %p67 = por %p65, %p66
    %p68 = scmp.ne.s32.totalorder %s60, %s63
    %p69 = scmp.eq.s32.totalorder %s10, 0
    %p70 = por %p68, %p69
    %p71 = scmp.ne.s32.totalorder %s60, %s63
    %p72 = scmp.eq.s32.totalorder %s15, 1
    %p73 = por %p71, %p72
    %p74 = scmp.ne.s32.totalorder %s63, %s64
    %p75 = scmp.eq.s32.totalorder %s15, 0
    %p76 = por %p74, %p75
    %p77 = scmp.ne.s32.totalorder %s63, %s64
    %p78 = scmp.eq.s32.totalorder %s16, 1
    %p79 = por %p77, %p78
    %p81 = scmp.ne.s32.totalorder %s64, %s80
    %p82 = scmp.eq.s32.totalorder %s16, 0
    %p83 = por %p81, %p82
    %s84 = ssub.s32 %s17, %s29
    %p85 = scmp.eq.s32.totalorder %s84, 0
    %s87 = sadd.s32 %s86, 1
    %s88 = scalar_select %p85, %s86, %s87
    %p91 = pneg %p85
    %p92 = scmp.eq.s32.totalorder %s10, 1
    %p93 = por %p91, %p92
    %p94 = scmp.ne.s32.totalorder %s86, %s89
    %p95 = scmp.eq.s32.totalorder %s10, 0
    %p96 = por %p94, %p95
    %p97 = scmp.ne.s32.totalorder %s86, %s89
    %p98 = scmp.eq.s32.totalorder %s15, 1
    %p99 = por %p97, %p98
    %p100 = scmp.ne.s32.totalorder %s89, %s90
    %p101 = scmp.eq.s32.totalorder %s15, 0
    %p102 = por %p100, %p101
    %p103 = scmp.ne.s32.totalorder %s89, %s90
    %p104 = scmp.eq.s32.totalorder %s16, 1
    %p105 = por %p103, %p104
    %p107 = scmp.ne.s32.totalorder %s90, %s106
    %p108 = scmp.eq.s32.totalorder %s16, 0
    %p109 = por %p107, %p108
    %s110 = ssub.s32 %s17, %s29
    %p111 = scmp.eq.s32.totalorder %s110, 0
    %s113 = sadd.s32 %s112, 1
    %s114 = scalar_select %p111, %s112, %s113
    %p117 = pneg %p111
    %p118 = scmp.eq.s32.totalorder %s10, 1
    %p119 = por %p117, %p118
    %p120 = scmp.ne.s32.totalorder %s112, %s115
    %p121 = scmp.eq.s32.totalorder %s10, 0
    %p122 = por %p120, %p121
    %p123 = scmp.ne.s32.totalorder %s112, %s115
    %p124 = scmp.eq.s32.totalorder %s15, 1
    %p125 = por %p123, %p124
    %p126 = scmp.ne.s32.totalorder %s115, %s116
    %p127 = scmp.eq.s32.totalorder %s15, 0
    %p128 = por %p126, %p127
    %p129 = scmp.ne.s32.totalorder %s115, %s116
    %p130 = scmp.eq.s32.totalorder %s16, 1
    %p131 = por %p129, %p130
    %p133 = scmp.ne.s32.totalorder %s116, %s132
    %p134 = scmp.eq.s32.totalorder %s16, 0
    %p135 = por %p133, %p134
    %p136 = scmp.le.s32.totalorder 1, %s10
    %p137 = scmp.lt.s32.totalorder %s10, 3
    %p138 = pnand %p136, %p137
    %p139 = pneg %p138
    // Predicated region
    $region9: #{cnn_add_margin_forward.3} parent=5 // pred_check
      _
    $region10: #{cnn_add_margin_forward.3} parent=5 // pred_check_branch
      %141 = sbr.rel (%p138) target = $region12
    $region11: #{cnn_add_margin_forward.3} parent=5 // pred_region
      %s142 = ssub.s32 %s10, 1
      // Predicated region
      $region13: #{cnn_add_margin_forward.3} parent=11 // pred_check
        %p143 = pneg %p76
      $region14: #{cnn_add_margin_forward.3} parent=11 // pred_check_branch
        %145 = sbr.rel (%p143) target = $region16
      $region15: #{cnn_add_margin_forward.3} parent=11 // pred_region
        %s146 = smul.u32 4, %s20
        %p147 = scmp.lt.s32.totalorder %s146, 3
        %s148 = scalar_select %p147, %s146, 3
        %s149 = smul.addr %s148, 4
        %s150 = scalar_lea.vmem %s1, %s149
        %s151 = smul.u32 4, %s20
      $region16: #{cnn_add_margin_forward.3} parent=11 // pred_fallthru
        _
    $region12: #{cnn_add_margin_forward.3} parent=5 // pred_fallthru
      _
    %p152 = scmp.lt.s32.totalorder %s10, 2
    // Predicated region
    $region17: #{cnn_add_margin_forward.3} parent=5 // pred_check
      %p153 = pneg %p152
    $region18: #{cnn_add_margin_forward.3} parent=5 // pred_check_branch
      %155 = sbr.rel (%p153) target = $region20
    $region19: #{cnn_add_margin_forward.3} parent=5 // pred_region
      // Predicated region
      $region21: #{cnn_add_margin_forward.3} parent=19 // pred_check
        %p156 = pneg %p44
      $region22: #{cnn_add_margin_forward.3} parent=19 // pred_check_branch
        %158 = sbr.rel (%p156) target = $region24
      $region23: #{cnn_add_margin_forward.3} parent=19 // pred_region
        %s159 = smul.u32 64, %s17
        %p160 = scmp.lt.s32.totalorder %s159, 127
        %s161 = scalar_select %p160, %s159, 127
        %p162 = scmp.lt.s32.totalorder %s18, 0
        %s163 = scalar_select %p162, %s18, 0
        %s164 = sadd.s32 %s163, %s161
        %s165 = smul.addr %s164, 4
        %s166 = scalar_lea.vmem %s0, %s165
        %s167 = smul.u32 64, %s17
      $region24: #{cnn_add_margin_forward.3} parent=19 // pred_fallthru
        _
    $region20: #{cnn_add_margin_forward.3} parent=5 // pred_fallthru
      _
    %p168 = scmp.le.s32.totalorder 1, %s10
    %p169 = scmp.lt.s32.totalorder %s10, 3
    %p170 = pnand %p168, %p169
    %p171 = pneg %p170
    // Predicated region
    $region25: #{cnn_add_margin_forward.3} parent=5 // pred_check
      _
    $region26: #{cnn_add_margin_forward.3} parent=5 // pred_check_branch
      %173 = sbr.rel (%p170) target = $region28
    $region27: #{cnn_add_margin_forward.3} parent=5 // pred_region
      %s174 = ssub.s32 %s10, 1
      %s175 = smul.u32 64, %s19
      %p176 = scmp.lt.s32.totalorder %s175, 127
      %s177 = scalar_select %p176, %s175, 127
      %p178 = scmp.lt.s32.totalorder %s20, 0
      %s179 = scalar_select %p178, %s20, 0
      %s180 = sadd.s32 %s179, %s177
      %s181 = smul.addr %s180, 4
      %s182 = scalar_lea.vmem %s0, %s181
      %p183 = pneg %p50
      %p184 = pneg %p47
      %s185 = smul.u32 4, %s20
      %p186 = scmp.lt.s32.totalorder %s185, 3
      %s187 = scalar_select %p186, %s185, 3
      %s188 = smul.addr %s187, 4
      %s189 = scalar_lea.vmem %s1, %s188
      %p190 = pneg %p76
      %p191 = pneg %p73
      %p192 = pneg %p102
      %p193 = pneg %p99
      %s194 = smul.u32 64, %s19
      %p195 = scmp.lt.s32.totalorder %s194, 127
      %s196 = scalar_select %p195, %s194, 127
      %s197 = smul.addr %s196, 4
      %s198 = scalar_lea.vmem %s2, %s197
      %p199 = pneg %p128
      %p200 = pneg %p125
      %p201 = scmp.lt.s32.totalorder %s19, 1
      %s202 = scalar_select %p201, %s19, 1
      %s203 = smul.addr %s202, 2
      %s204 = scalar_lea.vmem %s3, %s203
      %s205 = smul.u32 64, %s19
      %p206 = scmp.lt.s32.totalorder %s205, 127
      %s207 = scalar_select %p206, %s205, 127
      %p208 = scmp.lt.s32.totalorder %s20, 0
      %s209 = scalar_select %p208, %s20, 0
      %s210 = sadd.s32 %s209, %s207
      %s211 = smul.addr %s210, 4
      %s212 = scalar_lea.vmem %s0, %s211
      %s213 = smul.u32 64, %s19
      %s214 = smul.u32 4, %s20
      %p215 = scmp.lt.s32.totalorder %s214, 3
      %s216 = scalar_select %p215, %s214, 3
      %s217 = smul.addr %s216, 4
      %s218 = scalar_lea.vmem %s1, %s217
      %s219 = smul.u32 4, %s20
      %s220 = smul.u32 64, %s19
      %p221 = scmp.lt.s32.totalorder %s220, 127
      %s222 = scalar_select %p221, %s220, 127
      %s223 = smul.addr %s222, 4
      %s224 = scalar_lea.vmem %s2, %s223
      %s225 = smul.u32 64, %s19
      %p226 = scmp.lt.s32.totalorder %s19, 1
      %s227 = scalar_select %p226, %s19, 1
      %s228 = smul.addr %s227, 2
      %s229 = scalar_lea.vmem %s3, %s228
      %v231 = vld [vmem:[%s212] sm:$0xf]
      %v232 = vld [vmem:[%s212 + $0x4] sm:$0xf]
      %v233 = vld [vmem:[%s212 + $0x8] sm:$0xf]
      %v234 = vld [vmem:[%s212 + $0xc] sm:$0xf]
      %v235 = vld [vmem:[%s212 + $0x10] sm:$0xf]
      %v236 = vld [vmem:[%s212 + $0x14] sm:$0xf]
      %v237 = vld [vmem:[%s212 + $0x18] sm:$0xf]
      %v238 = vld [vmem:[%s212 + $0x1c] sm:$0xf]
      %v239 = vld [vmem:[%s212 + $0x20] sm:$0xf]
      %v240 = vld [vmem:[%s212 + $0x24] sm:$0xf]
      %v241 = vld [vmem:[%s212 + $0x28] sm:$0xf]
      %v242 = vld [vmem:[%s212 + $0x2c] sm:$0xf]
      %v243 = vld [vmem:[%s212 + $0x30] sm:$0xf]
      %v244 = vld [vmem:[%s212 + $0x34] sm:$0xf]
      %v245 = vld [vmem:[%s212 + $0x38] sm:$0xf]
      %v246 = vld [vmem:[%s212 + $0x3c] sm:$0xf]
      %v247 = vld [vmem:[%s212 + $0x40] sm:$0xf]
      %v248 = vld [vmem:[%s212 + $0x44] sm:$0xf]
      %v249 = vld [vmem:[%s212 + $0x48] sm:$0xf]
      %v250 = vld [vmem:[%s212 + $0x4c] sm:$0xf]
      %v251 = vld [vmem:[%s212 + $0x50] sm:$0xf]
      %v252 = vld [vmem:[%s212 + $0x54] sm:$0xf]
      %v253 = vld [vmem:[%s212 + $0x58] sm:$0xf]
      %v254 = vld [vmem:[%s212 + $0x5c] sm:$0xf]
      %v255 = vld [vmem:[%s212 + $0x60] sm:$0xf]
      %v256 = vld [vmem:[%s212 + $0x64] sm:$0xf]
      %v257 = vld [vmem:[%s212 + $0x68] sm:$0xf]
      %v258 = vld [vmem:[%s212 + $0x6c] sm:$0xf]
      %v259 = vld [vmem:[%s212 + $0x70] sm:$0xf]
      %v260 = vld [vmem:[%s212 + $0x74] sm:$0xf]
      %v261 = vld [vmem:[%s212 + $0x78] sm:$0xf]
      %v262 = vld [vmem:[%s212 + $0x7c] sm:$0xf]
      %v263 = vld [vmem:[%s212 + $0x80] sm:$0xf]
      %v264 = vld [vmem:[%s212 + $0x84] sm:$0xf]
      %v265 = vld [vmem:[%s212 + $0x88] sm:$0xf]
      %v266 = vld [vmem:[%s212 + $0x8c] sm:$0xf]
      %v267 = vld [vmem:[%s212 + $0x90] sm:$0xf]
      %v268 = vld [vmem:[%s212 + $0x94] sm:$0xf]
      %v269 = vld [vmem:[%s212 + $0x98] sm:$0xf]
      %v270 = vld [vmem:[%s212 + $0x9c] sm:$0xf]
      %v271 = vld [vmem:[%s212 + $0xa0] sm:$0xf]
      %v272 = vld [vmem:[%s212 + $0xa4] sm:$0xf]
      %v273 = vld [vmem:[%s212 + $0xa8] sm:$0xf]
      %v274 = vld [vmem:[%s212 + $0xac] sm:$0xf]
      %v275 = vld [vmem:[%s212 + $0xb0] sm:$0xf]
      %v276 = vld [vmem:[%s212 + $0xb4] sm:$0xf]
      %v277 = vld [vmem:[%s212 + $0xb8] sm:$0xf]
      %v278 = vld [vmem:[%s212 + $0xbc] sm:$0xf]
      %v279 = vld [vmem:[%s212 + $0xc0] sm:$0xf]
      %v280 = vld [vmem:[%s212 + $0xc4] sm:$0xf]
      %v281 = vld [vmem:[%s212 + $0xc8] sm:$0xf]
      %v282 = vld [vmem:[%s212 + $0xcc] sm:$0xf]
      %v283 = vld [vmem:[%s212 + $0xd0] sm:$0xf]
      %v284 = vld [vmem:[%s212 + $0xd4] sm:$0xf]
      %v285 = vld [vmem:[%s212 + $0xd8] sm:$0xf]
      %v286 = vld [vmem:[%s212 + $0xdc] sm:$0xf]
      %v287 = vld [vmem:[%s212 + $0xe0] sm:$0xf]
      %v288 = vld [vmem:[%s212 + $0xe4] sm:$0xf]
      %v289 = vld [vmem:[%s212 + $0xe8] sm:$0xf]
      %v290 = vld [vmem:[%s212 + $0xec] sm:$0xf]
      %v291 = vld [vmem:[%s212 + $0xf0] sm:$0xf]
      %v292 = vld [vmem:[%s212 + $0xf4] sm:$0xf]
      %v293 = vld [vmem:[%s212 + $0xf8] sm:$0xf]
      %v294 = vld [vmem:[%s212 + $0xfc] sm:$0xf]
      %v295 = vld [vmem:[%s218] sm:$0xf]
      %v296 = vld [vmem:[%s218 + $0x4] sm:$0xf]
      %v297 = vld [vmem:[%s218 + $0x8] sm:$0xf]
      %v298 = vld [vmem:[%s218 + $0xc] sm:$0x3]
      %v363 = vunpack.c.l.b16 %v231
      %v364 = vunpack.c.l.b16 %v232
      %v365 = vunpack.c.l.b16 %v233
      %v366 = vunpack.c.l.b16 %v234
      %v367 = vunpack.c.l.b16 %v235
      %v368 = vunpack.c.l.b16 %v236
      %v369 = vunpack.c.l.b16 %v237
      %v370 = vunpack.c.l.b16 %v238
      %v371 = vunpack.c.l.b16 %v239
      %v372 = vunpack.c.l.b16 %v240
      %v373 = vunpack.c.l.b16 %v241
      %v374 = vunpack.c.l.b16 %v242
      %v375 = vunpack.c.l.b16 %v243
      %v376 = vunpack.c.l.b16 %v244
      %v377 = vunpack.c.l.b16 %v245
      %v378 = vunpack.c.l.b16 %v246
      %v379 = vunpack.c.l.b16 %v247
      %v380 = vunpack.c.l.b16 %v248
      %v381 = vunpack.c.l.b16 %v249
      %v382 = vunpack.c.l.b16 %v250
      %v383 = vunpack.c.l.b16 %v251
      %v384 = vunpack.c.l.b16 %v252
      %v385 = vunpack.c.l.b16 %v253
      %v386 = vunpack.c.l.b16 %v254
      %v387 = vunpack.c.l.b16 %v255
      %v388 = vunpack.c.l.b16 %v256
      %v389 = vunpack.c.l.b16 %v257
      %v390 = vunpack.c.l.b16 %v258
      %v391 = vunpack.c.l.b16 %v259
      %v392 = vunpack.c.l.b16 %v260
      %v393 = vunpack.c.l.b16 %v261
      %v394 = vunpack.c.l.b16 %v262
      %v395 = vunpack.c.l.b16 %v263
      %v396 = vunpack.c.l.b16 %v264
      %v397 = vunpack.c.l.b16 %v265
      %v398 = vunpack.c.l.b16 %v266
      %v399 = vunpack.c.l.b16 %v267
      %v400 = vunpack.c.l.b16 %v268
      %v401 = vunpack.c.l.b16 %v269
      %v402 = vunpack.c.l.b16 %v270
      %v403 = vunpack.c.l.b16 %v271
      %v404 = vunpack.c.l.b16 %v272
      %v405 = vunpack.c.l.b16 %v273
      %v406 = vunpack.c.l.b16 %v274
      %v407 = vunpack.c.l.b16 %v275
      %v408 = vunpack.c.l.b16 %v276
      %v409 = vunpack.c.l.b16 %v277
      %v410 = vunpack.c.l.b16 %v278
      %v411 = vunpack.c.l.b16 %v279
      %v412 = vunpack.c.l.b16 %v280
      %v413 = vunpack.c.l.b16 %v281
      %v414 = vunpack.c.l.b16 %v282
      %v415 = vunpack.c.l.b16 %v283
      %v416 = vunpack.c.l.b16 %v284
      %v417 = vunpack.c.l.b16 %v285
      %v418 = vunpack.c.l.b16 %v286
      %v419 = vunpack.c.l.b16 %v287
      %v420 = vunpack.c.l.b16 %v288
      %v421 = vunpack.c.l.b16 %v289
      %v422 = vunpack.c.l.b16 %v290
      %v423 = vunpack.c.l.b16 %v291
      %v424 = vunpack.c.l.b16 %v292
      %v425 = vunpack.c.l.b16 %v293
      %v426 = vunpack.c.l.b16 %v294
      %v427 = vpack.c.b16 %v364, %v363
      %v428 = vpack.c.b16 %v366, %v365
      %v429 = vpack.c.b16 %v368, %v367
      %v430 = vpack.c.b16 %v370, %v369
      %v431 = vpack.c.b16 %v372, %v371
      %v432 = vpack.c.b16 %v374, %v373
      %v433 = vpack.c.b16 %v376, %v375
      %v434 = vpack.c.b16 %v378, %v377
      %v435 = vpack.c.b16 %v380, %v379
      %v436 = vpack.c.b16 %v382, %v381
      %v437 = vpack.c.b16 %v384, %v383
      %v438 = vpack.c.b16 %v386, %v385
      %v439 = vpack.c.b16 %v388, %v387
      %v440 = vpack.c.b16 %v390, %v389
      %v441 = vpack.c.b16 %v392, %v391
      %v442 = vpack.c.b16 %v394, %v393
      %v443 = vpack.c.b16 %v396, %v395
      %v444 = vpack.c.b16 %v398, %v397
      %v445 = vpack.c.b16 %v400, %v399
      %v446 = vpack.c.b16 %v402, %v401
      %v447 = vpack.c.b16 %v404, %v403
      %v448 = vpack.c.b16 %v406, %v405
      %v449 = vpack.c.b16 %v408, %v407
      %v450 = vpack.c.b16 %v410, %v409
      %v451 = vpack.c.b16 %v412, %v411
      %v452 = vpack.c.b16 %v414, %v413
      %v453 = vpack.c.b16 %v416, %v415
      %v454 = vpack.c.b16 %v418, %v417
      %v455 = vpack.c.b16 %v420, %v419
      %v456 = vpack.c.b16 %v422, %v421
      %v457 = vpack.c.b16 %v424, %v423
      %v458 = vpack.c.b16 %v426, %v425
      %v463 = vunpack.c.l.b16 %v295
      %v464 = vunpack.c.l.b16 %v296
      %v465 = vunpack.c.l.b16 %v297
      %v466 = vunpack.c.l.b16 %v298
      %v467 = vpack.c.b16 %v464, %v463
      %v468 = vpack.c.b16 %v466, %v465
      %vm470 = vcmask 220160
      %v472 = vsel %vm470, %v427, 0
      %v475 = vsel %vm470, %v428, 0
      %v478 = vsel %vm470, %v429, 0
      %v481 = vsel %vm470, %v430, 0
      %v484 = vsel %vm470, %v431, 0
      %v487 = vsel %vm470, %v432, 0
      %v490 = vsel %vm470, %v433, 0
      %v493 = vsel %vm470, %v434, 0
      %v496 = vsel %vm470, %v435, 0
      %v499 = vsel %vm470, %v436, 0
      %v502 = vsel %vm470, %v437, 0
      %v505 = vsel %vm470, %v438, 0
      %v508 = vsel %vm470, %v439, 0
      %v511 = vsel %vm470, %v440, 0
      %v514 = vsel %vm470, %v441, 0
      %v517 = vsel %vm470, %v442, 0
      %v520 = vsel %vm470, %v443, 0
      %v523 = vsel %vm470, %v444, 0
      %v526 = vsel %vm470, %v445, 0
      %v529 = vsel %vm470, %v446, 0
      %v532 = vsel %vm470, %v447, 0
      %v535 = vsel %vm470, %v448, 0
      %v538 = vsel %vm470, %v449, 0
      %v541 = vsel %vm470, %v450, 0
      %v544 = vsel %vm470, %v451, 0
      %v547 = vsel %vm470, %v452, 0
      %v550 = vsel %vm470, %v453, 0
      %v553 = vsel %vm470, %v454, 0
      %v556 = vsel %vm470, %v455, 0
      %v559 = vsel %vm470, %v456, 0
      %v562 = vsel %vm470, %v457, 0
      %v565 = vsel %vm470, %v458, 0
      %vm567 = vcmask 1044480
      %vm568 = vcmask 1045504
      %v569 = vsel %vm567, 4294967295, 65535
      %v570 = vsel %vm568, %v569, 0
      %v572 = vand.u32 %v468, %v570
      %574 = vmatprep.subr.bf16.mxu0 0
      %575 = vmatpush1.bf16.msra.mxu0 %v467
      %576 = vmatprep.subr.bf16.mxu0 0
      %577 = vmatpush1.bf16.msra.mxu0 %v572
      %578 = vmatprep.subr.bf16.mxu0 0
      %579 = vmatpush1.bf16.msra.mxu0 0
      %580 = vmatprep.subr.bf16.mxu0 0
      %581 = vmatpush1.bf16.msra.mxu0 0
      %582 = vmatprep.subr.bf16.mxu0 0
      %583 = vmatpush1.bf16.msra.mxu0 0
      %584 = vmatprep.subr.bf16.mxu0 0
      %585 = vmatpush1.bf16.msra.mxu0 0
      %586 = vmatprep.subr.bf16.mxu0 0
      %587 = vmatpush1.bf16.msra.mxu0 0
      %588 = vmatprep.subr.bf16.mxu0 0
      %589 = vmatpush1.bf16.msra.mxu0 0
      %590 = vmatprep.subr.bf16.mxu0 0
      %591 = vmatpush1.bf16.msra.mxu0 0
      %592 = vmatprep.subr.bf16.mxu0 0
      %593 = vmatpush1.bf16.msra.mxu0 0
      %594 = vmatprep.subr.bf16.mxu0 0
      %595 = vmatpush1.bf16.msra.mxu0 0
      %596 = vmatprep.subr.bf16.mxu0 0
      %597 = vmatpush1.bf16.msra.mxu0 0
      %598 = vmatprep.subr.bf16.mxu0 0
      %599 = vmatpush1.bf16.msra.mxu0 0
      %600 = vmatprep.subr.bf16.mxu0 0
      %601 = vmatpush1.bf16.msra.mxu0 0
      %602 = vmatprep.subr.bf16.mxu0 0
      %603 = vmatpush1.bf16.msra.mxu0 0
      %604 = vmatprep.subr.bf16.mxu0 0
      %605 = vmatpush1.bf16.msra.mxu0 0
      %606 = vmatprep.mubr.bf16.mxu0 0
      %607 = vmatmul.mubr.bf16.gmra.mrb[0].mxu0 %v472
      %v608 = vpop.f32.mrb[0].mxu0
      %v609 = vadd.f32 0.0, %v608
      %v610 = vpop.f32.mrb[0].mxu0
      %v611 = vpop.f32.mrb[0].mxu0
      %v612 = vadd.f32 0.0, %v611
      %v613 = vpop.f32.mrb[0].mxu0
      %614 = vmatprep.mubr.bf16.mxu0 0
      %615 = vmatmul.mubr.bf16.gmra.mrb[0].mxu0 %v475
      %v616 = vpop.f32.mrb[0].mxu0
      %v617 = vadd.f32 0.0, %v616
      %v618 = vpop.f32.mrb[0].mxu0
      %v619 = vpop.f32.mrb[0].mxu0
      %v620 = vadd.f32 0.0, %v619
      %v621 = vpop.f32.mrb[0].mxu0
      %622 = vmatprep.mubr.bf16.mxu0 0
      %623 = vmatmul.mubr.bf16.gmra.mrb[0].mxu0 %v478
      %v624 = vpop.f32.mrb[0].mxu0
      %v625 = vadd.f32 0.0, %v624
      %v626 = vpop.f32.mrb[0].mxu0
      %v627 = vpop.f32.mrb[0].mxu0
      %v628 = vadd.f32 0.0, %v627
      %v629 = vpop.f32.mrb[0].mxu0
      %630 = vmatprep.mubr.bf16.mxu0 0
      %631 = vmatmul.mubr.bf16.gmra.mrb[0].mxu0 %v481
      %v632 = vpop.f32.mrb[0].mxu0
      %v633 = vadd.f32 0.0, %v632
      %v634 = vpop.f32.mrb[0].mxu0
      %v635 = vpop.f32.mrb[0].mxu0
      %v636 = vadd.f32 0.0, %v635
      %v637 = vpop.f32.mrb[0].mxu0
      %638 = vmatprep.mubr.bf16.mxu0 0
      %639 = vmatmul.mubr.bf16.gmra.mrb[0].mxu0 %v484
      %v640 = vpop.f32.mrb[0].mxu0
      %v641 = vadd.f32 0.0, %v640
      %v642 = vpop.f32.mrb[0].mxu0
      %v643 = vpop.f32.mrb[0].mxu0
      %v644 = vadd.f32 0.0, %v643
      %v645 = vpop.f32.mrb[0].mxu0
      %646 = vmatprep.mubr.bf16.mxu0 0
      %647 = vmatmul.mubr.bf16.gmra.mrb[0].mxu0 %v487
      %v648 = vpop.f32.mrb[0].mxu0
      %v649 = vadd.f32 0.0, %v648
      %v650 = vpop.f32.mrb[0].mxu0
      %v651 = vpop.f32.mrb[0].mxu0
      %v652 = vadd.f32 0.0, %v651
      %v653 = vpop.f32.mrb[0].mxu0
      %654 = vmatprep.mubr.bf16.mxu0 0
      %655 = vmatmul.mubr.bf16.gmra.mrb[0].mxu0 %v490
      %v656 = vpop.f32.mrb[0].mxu0
      %v657 = vadd.f32 0.0, %v656
      %v658 = vpop.f32.mrb[0].mxu0
      %v659 = vpop.f32.mrb[0].mxu0
      %v660 = vadd.f32 0.0, %v659
      %v661 = vpop.f32.mrb[0].mxu0
      %662 = vmatprep.mubr.bf16.mxu0 0
      %663 = vmatmul.mubr.bf16.gmra.mrb[0].mxu0 %v493
      %v664 = vpop.f32.mrb[0].mxu0
      %v665 = vadd.f32 0.0, %v664
      %v666 = vpop.f32.mrb[0].mxu0
      %v667 = vpop.f32.mrb[0].mxu0
      %v668 = vadd.f32 0.0, %v667
      %v669 = vpop.f32.mrb[0].mxu0
      %670 = vmatprep.mubr.bf16.mxu0 0
      %671 = vmatmul.mubr.bf16.gmra.mrb[0].mxu0 %v496
      %v672 = vpop.f32.mrb[0].mxu0
      %v673 = vadd.f32 0.0, %v672
      %v674 = vpop.f32.mrb[0].mxu0
      %v675 = vpop.f32.mrb[0].mxu0
      %v676 = vadd.f32 0.0, %v675
      %v677 = vpop.f32.mrb[0].mxu0
      %678 = vmatprep.mubr.bf16.mxu0 0
      %679 = vmatmul.mubr.bf16.gmra.mrb[0].mxu0 %v499
      %v680 = vpop.f32.mrb[0].mxu0
      %v681 = vadd.f32 0.0, %v680
      %v682 = vpop.f32.mrb[0].mxu0
      %v683 = vpop.f32.mrb[0].mxu0
      %v684 = vadd.f32 0.0, %v683
      %v685 = vpop.f32.mrb[0].mxu0
      %686 = vmatprep.mubr.bf16.mxu0 0
      %687 = vmatmul.mubr.bf16.gmra.mrb[0].mxu0 %v502
      %v688 = vpop.f32.mrb[0].mxu0
      %v689 = vadd.f32 0.0, %v688
      %v690 = vpop.f32.mrb[0].mxu0
      %v691 = vpop.f32.mrb[0].mxu0
      %v692 = vadd.f32 0.0, %v691
      %v693 = vpop.f32.mrb[0].mxu0
      %694 = vmatprep.mubr.bf16.mxu0 0
      %695 = vmatmul.mubr.bf16.gmra.mrb[0].mxu0 %v505
      %v696 = vpop.f32.mrb[0].mxu0
      %v697 = vadd.f32 0.0, %v696
      %v698 = vpop.f32.mrb[0].mxu0
      %v699 = vpop.f32.mrb[0].mxu0
      %v700 = vadd.f32 0.0, %v699
      %v701 = vpop.f32.mrb[0].mxu0
      %702 = vmatprep.mubr.bf16.mxu0 0
      %703 = vmatmul.mubr.bf16.gmra.mrb[0].mxu0 %v508
      %v704 = vpop.f32.mrb[0].mxu0
      %v705 = vadd.f32 0.0, %v704
      %v706 = vpop.f32.mrb[0].mxu0
      %v707 = vpop.f32.mrb[0].mxu0
      %v708 = vadd.f32 0.0, %v707
      %v709 = vpop.f32.mrb[0].mxu0
      %710 = vmatprep.mubr.bf16.mxu0 0
      %711 = vmatmul.mubr.bf16.gmra.mrb[0].mxu0 %v511
      %v712 = vpop.f32.mrb[0].mxu0
      %v713 = vadd.f32 0.0, %v712
      %v714 = vpop.f32.mrb[0].mxu0
      %v715 = vpop.f32.mrb[0].mxu0
      %v716 = vadd.f32 0.0, %v715
      %v717 = vpop.f32.mrb[0].mxu0
      %718 = vmatprep.mubr.bf16.mxu0 0
      %719 = vmatmul.mubr.bf16.gmra.mrb[0].mxu0 %v514
      %v720 = vpop.f32.mrb[0].mxu0
      %v721 = vadd.f32 0.0, %v720
      %v722 = vpop.f32.mrb[0].mxu0
      %v723 = vpop.f32.mrb[0].mxu0
      %v724 = vadd.f32 0.0, %v723
      %v725 = vpop.f32.mrb[0].mxu0
      %726 = vmatprep.mubr.bf16.mxu0 0
      %727 = vmatmul.mubr.bf16.gmra.mrb[0].mxu0 %v517
      %v728 = vpop.f32.mrb[0].mxu0
      %v729 = vadd.f32 0.0, %v728
      %v730 = vpop.f32.mrb[0].mxu0
      %v731 = vpop.f32.mrb[0].mxu0
      %v732 = vadd.f32 0.0, %v731
      %v733 = vpop.f32.mrb[0].mxu0
      %734 = vmatprep.mubr.bf16.mxu0 0
      %735 = vmatmul.mubr.bf16.gmra.mrb[0].mxu0 %v520
      %v736 = vpop.f32.mrb[0].mxu0
      %v737 = vadd.f32 0.0, %v736
      %v738 = vpop.f32.mrb[0].mxu0
      %v739 = vpop.f32.mrb[0].mxu0
      %v740 = vadd.f32 0.0, %v739
      %v741 = vpop.f32.mrb[0].mxu0
      %742 = vmatprep.mubr.bf16.mxu0 0
      %743 = vmatmul.mubr.bf16.gmra.mrb[0].mxu0 %v523
      %v744 = vpop.f32.mrb[0].mxu0
      %v745 = vadd.f32 0.0, %v744
      %v746 = vpop.f32.mrb[0].mxu0
      %v747 = vpop.f32.mrb[0].mxu0
      %v748 = vadd.f32 0.0, %v747
      %v749 = vpop.f32.mrb[0].mxu0
      %750 = vmatprep.mubr.bf16.mxu0 0
      %751 = vmatmul.mubr.bf16.gmra.mrb[0].mxu0 %v526
      %v752 = vpop.f32.mrb[0].mxu0
      %v753 = vadd.f32 0.0, %v752
      %v754 = vpop.f32.mrb[0].mxu0
      %v755 = vpop.f32.mrb[0].mxu0
      %v756 = vadd.f32 0.0, %v755
      %v757 = vpop.f32.mrb[0].mxu0
      %758 = vmatprep.mubr.bf16.mxu0 0
      %759 = vmatmul.mubr.bf16.gmra.mrb[0].mxu0 %v529
      %v760 = vpop.f32.mrb[0].mxu0
      %v761 = vadd.f32 0.0, %v760
      %v762 = vpop.f32.mrb[0].mxu0
      %v763 = vpop.f32.mrb[0].mxu0
      %v764 = vadd.f32 0.0, %v763
      %v765 = vpop.f32.mrb[0].mxu0
      %766 = vmatprep.mubr.bf16.mxu0 0
      %767 = vmatmul.mubr.bf16.gmra.mrb[0].mxu0 %v532
      %v768 = vpop.f32.mrb[0].mxu0
      %v769 = vadd.f32 0.0, %v768
      %v770 = vpop.f32.mrb[0].mxu0
      %v771 = vpop.f32.mrb[0].mxu0
      %v772 = vadd.f32 0.0, %v771
      %v773 = vpop.f32.mrb[0].mxu0
      %774 = vmatprep.mubr.bf16.mxu0 0
      %775 = vmatmul.mubr.bf16.gmra.mrb[0].mxu0 %v535
      %v776 = vpop.f32.mrb[0].mxu0
      %v777 = vadd.f32 0.0, %v776
      %v778 = vpop.f32.mrb[0].mxu0
      %v779 = vpop.f32.mrb[0].mxu0
      %v780 = vadd.f32 0.0, %v779
      %v781 = vpop.f32.mrb[0].mxu0
      %782 = vmatprep.mubr.bf16.mxu0 0
      %783 = vmatmul.mubr.bf16.gmra.mrb[0].mxu0 %v538
      %v784 = vpop.f32.mrb[0].mxu0
      %v785 = vadd.f32 0.0, %v784
      %v786 = vpop.f32.mrb[0].mxu0
      %v787 = vpop.f32.mrb[0].mxu0
      %v788 = vadd.f32 0.0, %v787
      %v789 = vpop.f32.mrb[0].mxu0
      %790 = vmatprep.mubr.bf16.mxu0 0
      %791 = vmatmul.mubr.bf16.gmra.mrb[0].mxu0 %v541
      %v792 = vpop.f32.mrb[0].mxu0
      %v793 = vadd.f32 0.0, %v792
      %v794 = vpop.f32.mrb[0].mxu0
      %v795 = vpop.f32.mrb[0].mxu0
      %v796 = vadd.f32 0.0, %v795
      %v797 = vpop.f32.mrb[0].mxu0
      %798 = vmatprep.mubr.bf16.mxu0 0
      %799 = vmatmul.mubr.bf16.gmra.mrb[0].mxu0 %v544
      %v800 = vpop.f32.mrb[0].mxu0
      %v801 = vadd.f32 0.0, %v800
      %v802 = vpop.f32.mrb[0].mxu0
      %v803 = vpop.f32.mrb[0].mxu0
      %v804 = vadd.f32 0.0, %v803
      %v805 = vpop.f32.mrb[0].mxu0
      %806 = vmatprep.mubr.bf16.mxu0 0
      %807 = vmatmul.mubr.bf16.gmra.mrb[0].mxu0 %v547
      %v808 = vpop.f32.mrb[0].mxu0
      %v809 = vadd.f32 0.0, %v808
      %v810 = vpop.f32.mrb[0].mxu0
      %v811 = vpop.f32.mrb[0].mxu0
      %v812 = vadd.f32 0.0, %v811
      %v813 = vpop.f32.mrb[0].mxu0
      %814 = vmatprep.mubr.bf16.mxu0 0
      %815 = vmatmul.mubr.bf16.gmra.mrb[0].mxu0 %v550
      %v816 = vpop.f32.mrb[0].mxu0
      %v817 = vadd.f32 0.0, %v816
      %v818 = vpop.f32.mrb[0].mxu0
      %v819 = vpop.f32.mrb[0].mxu0
      %v820 = vadd.f32 0.0, %v819
      %v821 = vpop.f32.mrb[0].mxu0
      %822 = vmatprep.mubr.bf16.mxu0 0
      %823 = vmatmul.mubr.bf16.gmra.mrb[0].mxu0 %v553
      %v824 = vpop.f32.mrb[0].mxu0
      %v825 = vadd.f32 0.0, %v824
      %v826 = vpop.f32.mrb[0].mxu0
      %v827 = vpop.f32.mrb[0].mxu0
      %v828 = vadd.f32 0.0, %v827
      %v829 = vpop.f32.mrb[0].mxu0
      %830 = vmatprep.mubr.bf16.mxu0 0
      %831 = vmatmul.mubr.bf16.gmra.mrb[0].mxu0 %v556
      %v832 = vpop.f32.mrb[0].mxu0
      %v833 = vadd.f32 0.0, %v832
      %v834 = vpop.f32.mrb[0].mxu0
      %v835 = vpop.f32.mrb[0].mxu0
      %v836 = vadd.f32 0.0, %v835
      %v837 = vpop.f32.mrb[0].mxu0
      %838 = vmatprep.mubr.bf16.mxu0 0
      %839 = vmatmul.mubr.bf16.gmra.mrb[0].mxu0 %v559
      %v840 = vpop.f32.mrb[0].mxu0
      %v841 = vadd.f32 0.0, %v840
      %v842 = vpop.f32.mrb[0].mxu0
      %v843 = vpop.f32.mrb[0].mxu0
      %v844 = vadd.f32 0.0, %v843
      %v845 = vpop.f32.mrb[0].mxu0
      %846 = vmatprep.mubr.bf16.mxu0 0
      %847 = vmatmul.mubr.bf16.gmra.mrb[0].mxu0 %v562
      %v848 = vpop.f32.mrb[0].mxu0
      %v849 = vadd.f32 0.0, %v848
      %v850 = vpop.f32.mrb[0].mxu0
      %v851 = vpop.f32.mrb[0].mxu0
      %v852 = vadd.f32 0.0, %v851
      %v853 = vpop.f32.mrb[0].mxu0
      %854 = vmatprep.mubr.bf16.mxu0 0
      %855 = vmatmul.mubr.bf16.gmra.mrb[0].mxu0 %v565
      %v856 = vpop.f32.mrb[0].mxu0
      %v857 = vadd.f32 0.0, %v856
      %v858 = vpop.f32.mrb[0].mxu0
      %v859 = vpop.f32.mrb[0].mxu0
      %v860 = vadd.f32 0.0, %v859
      %v861 = vpop.f32.mrb[0].mxu0
      %862 = vdwg.mxu0
      %v863 = vpack.c.bf16 %v612, %v609
      %v864 = vpack.c.bf16 %v620, %v617
      %v865 = vpack.c.bf16 %v628, %v625
      %v866 = vpack.c.bf16 %v636, %v633
      %v867 = vpack.c.bf16 %v644, %v641
      %v868 = vpack.c.bf16 %v652, %v649
      %v869 = vpack.c.bf16 %v660, %v657
      %v870 = vpack.c.bf16 %v668, %v665
      %v871 = vpack.c.bf16 %v676, %v673
      %v872 = vpack.c.bf16 %v684, %v681
      %v873 = vpack.c.bf16 %v692, %v689
      %v874 = vpack.c.bf16 %v700, %v697
      %v875 = vpack.c.bf16 %v708, %v705
      %v876 = vpack.c.bf16 %v716, %v713
      %v877 = vpack.c.bf16 %v724, %v721
      %v878 = vpack.c.bf16 %v732, %v729
      %v879 = vpack.c.bf16 %v740, %v737
      %v880 = vpack.c.bf16 %v748, %v745
      %v881 = vpack.c.bf16 %v756, %v753
      %v882 = vpack.c.bf16 %v764, %v761
      %v883 = vpack.c.bf16 %v772, %v769
      %v884 = vpack.c.bf16 %v780, %v777
      %v885 = vpack.c.bf16 %v788, %v785
      %v886 = vpack.c.bf16 %v796, %v793
      %v887 = vpack.c.bf16 %v804, %v801
      %v888 = vpack.c.bf16 %v812, %v809
      %v889 = vpack.c.bf16 %v820, %v817
      %v890 = vpack.c.bf16 %v828, %v825
      %v891 = vpack.c.bf16 %v836, %v833
      %v892 = vpack.c.bf16 %v844, %v841
      %v893 = vpack.c.bf16 %v852, %v849
      %v894 = vpack.c.bf16 %v860, %v857
      %v927 = vunpack.c.l.b16 %v863
      %v928 = vunpack.c.h.b16 %v863
      %v929 = vunpack.c.l.b16 %v864
      %v930 = vunpack.c.h.b16 %v864
      %v931 = vunpack.c.l.b16 %v865
      %v932 = vunpack.c.h.b16 %v865
      %v933 = vunpack.c.l.b16 %v866
      %v934 = vunpack.c.h.b16 %v866
      %v935 = vunpack.c.l.b16 %v867
      %v936 = vunpack.c.h.b16 %v867
      %v937 = vunpack.c.l.b16 %v868
      %v938 = vunpack.c.h.b16 %v868
      %v939 = vunpack.c.l.b16 %v869
      %v940 = vunpack.c.h.b16 %v869
      %v941 = vunpack.c.l.b16 %v870
      %v942 = vunpack.c.h.b16 %v870
      %v943 = vunpack.c.l.b16 %v871
      %v944 = vunpack.c.h.b16 %v871
      %v945 = vunpack.c.l.b16 %v872
      %v946 = vunpack.c.h.b16 %v872
      %v947 = vunpack.c.l.b16 %v873
      %v948 = vunpack.c.h.b16 %v873
      %v949 = vunpack.c.l.b16 %v874
      %v950 = vunpack.c.h.b16 %v874
      %v951 = vunpack.c.l.b16 %v875
      %v952 = vunpack.c.h.b16 %v875
      %v953 = vunpack.c.l.b16 %v876
      %v954 = vunpack.c.h.b16 %v876
      %v955 = vunpack.c.l.b16 %v877
      %v956 = vunpack.c.h.b16 %v877
      %v957 = vunpack.c.l.b16 %v878
      %v958 = vunpack.c.h.b16 %v878
      %v959 = vunpack.c.l.b16 %v879
      %v960 = vunpack.c.h.b16 %v879
      %v961 = vunpack.c.l.b16 %v880
      %v962 = vunpack.c.h.b16 %v880
      %v963 = vunpack.c.l.b16 %v881
      %v964 = vunpack.c.h.b16 %v881
      %v965 = vunpack.c.l.b16 %v882
      %v966 = vunpack.c.h.b16 %v882
      %v967 = vunpack.c.l.b16 %v883
      %v968 = vunpack.c.h.b16 %v883
      %v969 = vunpack.c.l.b16 %v884
      %v970 = vunpack.c.h.b16 %v884
      %v971 = vunpack.c.l.b16 %v885
      %v972 = vunpack.c.h.b16 %v885
      %v973 = vunpack.c.l.b16 %v886
      %v974 = vunpack.c.h.b16 %v886
      %v975 = vunpack.c.l.b16 %v887
      %v976 = vunpack.c.h.b16 %v887
      %v977 = vunpack.c.l.b16 %v888
      %v978 = vunpack.c.h.b16 %v888
      %v979 = vunpack.c.l.b16 %v889
      %v980 = vunpack.c.h.b16 %v889
      %v981 = vunpack.c.l.b16 %v890
      %v982 = vunpack.c.h.b16 %v890
      %v983 = vunpack.c.l.b16 %v891
      %v984 = vunpack.c.h.b16 %v891
      %v985 = vunpack.c.l.b16 %v892
      %v986 = vunpack.c.h.b16 %v892
      %v987 = vunpack.c.l.b16 %v893
      %v988 = vunpack.c.h.b16 %v893
      %v989 = vunpack.c.l.b16 %v894
      %v990 = vunpack.c.h.b16 %v894
      %v991 = vpack.c.b16 %v927, %v927
      %v992 = vpack.c.b16 %v928, %v928
      %v993 = vpack.c.b16 %v929, %v929
      %v994 = vpack.c.b16 %v930, %v930
      %v995 = vpack.c.b16 %v931, %v931
      %v996 = vpack.c.b16 %v932, %v932
      %v997 = vpack.c.b16 %v933, %v933
      %v998 = vpack.c.b16 %v934, %v934
      %v999 = vpack.c.b16 %v935, %v935
      %v1000 = vpack.c.b16 %v936, %v936
      %v1001 = vpack.c.b16 %v937, %v937
      %v1002 = vpack.c.b16 %v938, %v938
      %v1003 = vpack.c.b16 %v939, %v939
      %v1004 = vpack.c.b16 %v940, %v940
      %v1005 = vpack.c.b16 %v941, %v941
      %v1006 = vpack.c.b16 %v942, %v942
      %v1007 = vpack.c.b16 %v943, %v943
      %v1008 = vpack.c.b16 %v944, %v944
      %v1009 = vpack.c.b16 %v945, %v945
      %v1010 = vpack.c.b16 %v946, %v946
      %v1011 = vpack.c.b16 %v947, %v947
      %v1012 = vpack.c.b16 %v948, %v948
      %v1013 = vpack.c.b16 %v949, %v949
      %v1014 = vpack.c.b16 %v950, %v950
      %v1015 = vpack.c.b16 %v951, %v951
      %v1016 = vpack.c.b16 %v952, %v952
      %v1017 = vpack.c.b16 %v953, %v953
      %v1018 = vpack.c.b16 %v954, %v954
      %v1019 = vpack.c.b16 %v955, %v955
      %v1020 = vpack.c.b16 %v956, %v956
      %v1021 = vpack.c.b16 %v957, %v957
      %v1022 = vpack.c.b16 %v958, %v958
      %v1023 = vpack.c.b16 %v959, %v959
      %v1024 = vpack.c.b16 %v960, %v960
      %v1025 = vpack.c.b16 %v961, %v961
      %v1026 = vpack.c.b16 %v962, %v962
      %v1027 = vpack.c.b16 %v963, %v963
      %v1028 = vpack.c.b16 %v964, %v964
      %v1029 = vpack.c.b16 %v965, %v965
      %v1030 = vpack.c.b16 %v966, %v966
      %v1031 = vpack.c.b16 %v967, %v967
      %v1032 = vpack.c.b16 %v968, %v968
      %v1033 = vpack.c.b16 %v969, %v969
      %v1034 = vpack.c.b16 %v970, %v970
      %v1035 = vpack.c.b16 %v971, %v971
      %v1036 = vpack.c.b16 %v972, %v972
      %v1037 = vpack.c.b16 %v973, %v973
      %v1038 = vpack.c.b16 %v974, %v974
      %v1039 = vpack.c.b16 %v975, %v975
      %v1040 = vpack.c.b16 %v976, %v976
      %v1041 = vpack.c.b16 %v977, %v977
      %v1042 = vpack.c.b16 %v978, %v978
      %v1043 = vpack.c.b16 %v979, %v979
      %v1044 = vpack.c.b16 %v980, %v980
      %v1045 = vpack.c.b16 %v981, %v981
      %v1046 = vpack.c.b16 %v982, %v982
      %v1047 = vpack.c.b16 %v983, %v983
      %v1048 = vpack.c.b16 %v984, %v984
      %v1049 = vpack.c.b16 %v985, %v985
      %v1050 = vpack.c.b16 %v986, %v986
      %v1051 = vpack.c.b16 %v987, %v987
      %v1052 = vpack.c.b16 %v988, %v988
      %v1053 = vpack.c.b16 %v989, %v989
      %v1054 = vpack.c.b16 %v990, %v990
      %1119 = vst [vmem:[%s224] sm:$0xf] %v991
      %1120 = vst [vmem:[%s224 + $0x4] sm:$0xf] %v992
      %1121 = vst [vmem:[%s224 + $0x8] sm:$0xf] %v993
      %1122 = vst [vmem:[%s224 + $0xc] sm:$0xf] %v994
      %1123 = vst [vmem:[%s224 + $0x10] sm:$0xf] %v995
      %1124 = vst [vmem:[%s224 + $0x14] sm:$0xf] %v996
      %1125 = vst [vmem:[%s224 + $0x18] sm:$0xf] %v997
      %1126 = vst [vmem:[%s224 + $0x1c] sm:$0xf] %v998
      %1127 = vst [vmem:[%s224 + $0x20] sm:$0xf] %v999
      %1128 = vst [vmem:[%s224 + $0x24] sm:$0xf] %v1000
      %1129 = vst [vmem:[%s224 + $0x28] sm:$0xf] %v1001
      %1130 = vst [vmem:[%s224 + $0x2c] sm:$0xf] %v1002
      %1131 = vst [vmem:[%s224 + $0x30] sm:$0xf] %v1003
      %1132 = vst [vmem:[%s224 + $0x34] sm:$0xf] %v1004
      %1133 = vst [vmem:[%s224 + $0x38] sm:$0xf] %v1005
      %1134 = vst [vmem:[%s224 + $0x3c] sm:$0xf] %v1006
      %1135 = vst [vmem:[%s224 + $0x40] sm:$0xf] %v1007
      %1136 = vst [vmem:[%s224 + $0x44] sm:$0xf] %v1008
      %1137 = vst [vmem:[%s224 + $0x48] sm:$0xf] %v1009
      %1138 = vst [vmem:[%s224 + $0x4c] sm:$0xf] %v1010
      %1139 = vst [vmem:[%s224 + $0x50] sm:$0xf] %v1011
      %1140 = vst [vmem:[%s224 + $0x54] sm:$0xf] %v1012
      %1141 = vst [vmem:[%s224 + $0x58] sm:$0xf] %v1013
      %1142 = vst [vmem:[%s224 + $0x5c] sm:$0xf] %v1014
      %1143 = vst [vmem:[%s224 + $0x60] sm:$0xf] %v1015
      %1144 = vst [vmem:[%s224 + $0x64] sm:$0xf] %v1016
      %1145 = vst [vmem:[%s224 + $0x68] sm:$0xf] %v1017
      %1146 = vst [vmem:[%s224 + $0x6c] sm:$0xf] %v1018
      %1147 = vst [vmem:[%s224 + $0x70] sm:$0xf] %v1019
      %1148 = vst [vmem:[%s224 + $0x74] sm:$0xf] %v1020
      %1149 = vst [vmem:[%s224 + $0x78] sm:$0xf] %v1021
      %1150 = vst [vmem:[%s224 + $0x7c] sm:$0xf] %v1022
      %1151 = vst [vmem:[%s224 + $0x80] sm:$0xf] %v1023
      %1152 = vst [vmem:[%s224 + $0x84] sm:$0xf] %v1024
      %1153 = vst [vmem:[%s224 + $0x88] sm:$0xf] %v1025
      %1154 = vst [vmem:[%s224 + $0x8c] sm:$0xf] %v1026
      %1155 = vst [vmem:[%s224 + $0x90] sm:$0xf] %v1027
      %1156 = vst [vmem:[%s224 + $0x94] sm:$0xf] %v1028
      %1157 = vst [vmem:[%s224 + $0x98] sm:$0xf] %v1029
      %1158 = vst [vmem:[%s224 + $0x9c] sm:$0xf] %v1030
      %1159 = vst [vmem:[%s224 + $0xa0] sm:$0xf] %v1031
      %1160 = vst [vmem:[%s224 + $0xa4] sm:$0xf] %v1032
      %1161 = vst [vmem:[%s224 + $0xa8] sm:$0xf] %v1033
      %1162 = vst [vmem:[%s224 + $0xac] sm:$0xf] %v1034
      %1163 = vst [vmem:[%s224 + $0xb0] sm:$0xf] %v1035
      %1164 = vst [vmem:[%s224 + $0xb4] sm:$0xf] %v1036
      %1165 = vst [vmem:[%s224 + $0xb8] sm:$0xf] %v1037
      %1166 = vst [vmem:[%s224 + $0xbc] sm:$0xf] %v1038
      %1167 = vst [vmem:[%s224 + $0xc0] sm:$0xf] %v1039
      %1168 = vst [vmem:[%s224 + $0xc4] sm:$0xf] %v1040
      %1169 = vst [vmem:[%s224 + $0xc8] sm:$0xf] %v1041
      %1170 = vst [vmem:[%s224 + $0xcc] sm:$0xf] %v1042
      %1171 = vst [vmem:[%s224 + $0xd0] sm:$0xf] %v1043
      %1172 = vst [vmem:[%s224 + $0xd4] sm:$0xf] %v1044
      %1173 = vst [vmem:[%s224 + $0xd8] sm:$0xf] %v1045
      %1174 = vst [vmem:[%s224 + $0xdc] sm:$0xf] %v1046
      %1175 = vst [vmem:[%s224 + $0xe0] sm:$0xf] %v1047
      %1176 = vst [vmem:[%s224 + $0xe4] sm:$0xf] %v1048
      %1177 = vst [vmem:[%s224 + $0xe8] sm:$0xf] %v1049
      %1178 = vst [vmem:[%s224 + $0xec] sm:$0xf] %v1050
      %1179 = vst [vmem:[%s224 + $0xf0] sm:$0xf] %v1051
      %1180 = vst [vmem:[%s224 + $0xf4] sm:$0xf] %v1052
      %1181 = vst [vmem:[%s224 + $0xf8] sm:$0xf] %v1053
      %1182 = vst [vmem:[%s224 + $0xfc] sm:$0xf] %v1054
      %v1183 = vadd.f32 %v609, %v612
      %v1184 = vadd.f32 %v1183, %v617
      %v1185 = vadd.f32 %v1184, %v620
      %v1186 = vadd.f32 %v1185, %v625
      %v1187 = vadd.f32 %v1186, %v628
      %v1188 = vadd.f32 %v1187, %v633
      %v1189 = vadd.f32 %v1188, %v636
      %v1190 = vadd.f32 %v1189, %v641
      %v1191 = vadd.f32 %v1190, %v644
      %v1192 = vadd.f32 %v1191, %v649
      %v1193 = vadd.f32 %v1192, %v652
      %v1194 = vadd.f32 %v1193, %v657
      %v1195 = vadd.f32 %v1194, %v660
      %v1196 = vadd.f32 %v1195, %v665
      %v1197 = vadd.f32 %v1196, %v668
      %v1198 = vadd.f32 %v1197, %v673
      %v1199 = vadd.f32 %v1198, %v676
      %v1200 = vadd.f32 %v1199, %v681
      %v1201 = vadd.f32 %v1200, %v684
      %v1202 = vadd.f32 %v1201, %v689
      %v1203 = vadd.f32 %v1202, %v692
      %v1204 = vadd.f32 %v1203, %v697
      %v1205 = vadd.f32 %v1204, %v700
      %v1206 = vadd.f32 %v1205, %v705
      %v1207 = vadd.f32 %v1206, %v708
      %v1208 = vadd.f32 %v1207, %v713
      %v1209 = vadd.f32 %v1208, %v716
      %v1210 = vadd.f32 %v1209, %v721
      %v1211 = vadd.f32 %v1210, %v724
      %v1212 = vadd.f32 %v1211, %v729
      %v1213 = vadd.f32 %v1212, %v732
      %v1214 = vadd.f32 %v1213, %v737
      %v1215 = vadd.f32 %v1214, %v740
      %v1216 = vadd.f32 %v1215, %v745
      %v1217 = vadd.f32 %v1216, %v748
      %v1218 = vadd.f32 %v1217, %v753
      %v1219 = vadd.f32 %v1218, %v756
      %v1220 = vadd.f32 %v1219, %v761
      %v1221 = vadd.f32 %v1220, %v764
      %v1222 = vadd.f32 %v1221, %v769
      %v1223 = vadd.f32 %v1222, %v772
      %v1224 = vadd.f32 %v1223, %v777
      %v1225 = vadd.f32 %v1224, %v780
      %v1226 = vadd.f32 %v1225, %v785
      %v1227 = vadd.f32 %v1226, %v788
      %v1228 = vadd.f32 %v1227, %v793
      %v1229 = vadd.f32 %v1228, %v796
      %v1230 = vadd.f32 %v1229, %v801
      %v1231 = vadd.f32 %v1230, %v804
      %v1232 = vadd.f32 %v1231, %v809
      %v1233 = vadd.f32 %v1232, %v812
      %v1234 = vadd.f32 %v1233, %v817
      %v1235 = vadd.f32 %v1234, %v820
      %v1236 = vadd.f32 %v1235, %v825
      %v1237 = vadd.f32 %v1236, %v828
      %v1238 = vadd.f32 %v1237, %v833
      %v1239 = vadd.f32 %v1238, %v836
      %v1240 = vadd.f32 %v1239, %v841
      %v1241 = vadd.f32 %v1240, %v844
      %v1242 = vadd.f32 %v1241, %v849
      %v1243 = vadd.f32 %v1242, %v852
      %v1244 = vadd.f32 %v1243, %v857
      %v1245 = vadd.f32 %v1244, %v860
      %v1246 = vrot.slane %v1245, 4
      %v1247 = vadd.f32 %v1245, %v1246
      %v1248 = vrot.slane %v1247, 2
      %v1249 = vadd.f32 %v1247, %v1248
      %v1250 = vrot.slane %v1249, 1
      %v1251 = vadd.f32 %v1249, %v1250
      %1252 = vst [vmem:[%s229] sm:$0x1] %v1251
      %v1253 = vmul.f32 %v609, %v609
      %v1254 = vmul.f32 %v612, %v612
      %v1255 = vmul.f32 %v617, %v617
      %v1256 = vmul.f32 %v620, %v620
      %v1257 = vmul.f32 %v625, %v625
      %v1258 = vmul.f32 %v628, %v628
      %v1259 = vmul.f32 %v633, %v633
      %v1260 = vmul.f32 %v636, %v636
      %v1261 = vmul.f32 %v641, %v641
      %v1262 = vmul.f32 %v644, %v644
      %v1263 = vmul.f32 %v649, %v649
      %v1264 = vmul.f32 %v652, %v652
      %v1265 = vmul.f32 %v657, %v657
      %v1266 = vmul.f32 %v660, %v660
      %v1267 = vmul.f32 %v665, %v665
      %v1268 = vmul.f32 %v668, %v668
      %v1269 = vmul.f32 %v673, %v673
      %v1270 = vmul.f32 %v676, %v676
      %v1271 = vmul.f32 %v681, %v681
      %v1272 = vmul.f32 %v684, %v684
      %v1273 = vmul.f32 %v689, %v689
      %v1274 = vmul.f32 %v692, %v692
      %v1275 = vmul.f32 %v697, %v697
      %v1276 = vmul.f32 %v700, %v700
      %v1277 = vmul.f32 %v705, %v705
      %v1278 = vmul.f32 %v708, %v708
      %v1279 = vmul.f32 %v713, %v713
      %v1280 = vmul.f32 %v716, %v716
      %v1281 = vmul.f32 %v721, %v721
      %v1282 = vmul.f32 %v724, %v724
      %v1283 = vmul.f32 %v729, %v729
      %v1284 = vmul.f32 %v732, %v732
      %v1285 = vmul.f32 %v737, %v737
      %v1286 = vmul.f32 %v740, %v740
      %v1287 = vmul.f32 %v745, %v745
      %v1288 = vmul.f32 %v748, %v748
      %v1289 = vmul.f32 %v753, %v753
      %v1290 = vmul.f32 %v756, %v756
      %v1291 = vmul.f32 %v761, %v761
      %v1292 = vmul.f32 %v764, %v764
      %v1293 = vmul.f32 %v769, %v769
      %v1294 = vmul.f32 %v772, %v772
      %v1295 = vmul.f32 %v777, %v777
      %v1296 = vmul.f32 %v780, %v780
      %v1297 = vmul.f32 %v785, %v785
      %v1298 = vmul.f32 %v788, %v788
      %v1299 = vmul.f32 %v793, %v793
      %v1300 = vmul.f32 %v796, %v796
      %v1301 = vmul.f32 %v801, %v801
      %v1302 = vmul.f32 %v804, %v804
      %v1303 = vmul.f32 %v809, %v809
      %v1304 = vmul.f32 %v812, %v812
      %v1305 = vmul.f32 %v817, %v817
      %v1306 = vmul.f32 %v820, %v820
      %v1307 = vmul.f32 %v825, %v825
      %v1308 = vmul.f32 %v828, %v828
      %v1309 = vmul.f32 %v833, %v833
      %v1310 = vmul.f32 %v836, %v836
      %v1311 = vmul.f32 %v841, %v841
      %v1312 = vmul.f32 %v844, %v844
      %v1313 = vmul.f32 %v849, %v849
      %v1314 = vmul.f32 %v852, %v852
      %v1315 = vmul.f32 %v857, %v857
      %v1316 = vmul.f32 %v860, %v860
      %v1317 = vadd.f32 %v1253, %v1254
      %v1318 = vadd.f32 %v1317, %v1255
      %v1319 = vadd.f32 %v1318, %v1256
      %v1320 = vadd.f32 %v1319, %v1257
      %v1321 = vadd.f32 %v1320, %v1258
      %v1322 = vadd.f32 %v1321, %v1259
      %v1323 = vadd.f32 %v1322, %v1260
      %v1324 = vadd.f32 %v1323, %v1261
      %v1325 = vadd.f32 %v1324, %v1262
      %v1326 = vadd.f32 %v1325, %v1263
      %v1327 = vadd.f32 %v1326, %v1264
      %v1328 = vadd.f32 %v1327, %v1265
      %v1329 = vadd.f32 %v1328, %v1266
      %v1330 = vadd.f32 %v1329, %v1267
      %v1331 = vadd.f32 %v1330, %v1268
      %v1332 = vadd.f32 %v1331, %v1269
      %v1333 = vadd.f32 %v1332, %v1270
      %v1334 = vadd.f32 %v1333, %v1271
      %v1335 = vadd.f32 %v1334, %v1272
      %v1336 = vadd.f32 %v1335, %v1273
      %v1337 = vadd.f32 %v1336, %v1274
      %v1338 = vadd.f32 %v1337, %v1275
      %v1339 = vadd.f32 %v1338, %v1276
      %v1340 = vadd.f32 %v1339, %v1277
      %v1341 = vadd.f32 %v1340, %v1278
      %v1342 = vadd.f32 %v1341, %v1279
      %v1343 = vadd.f32 %v1342, %v1280
      %v1344 = vadd.f32 %v1343, %v1281
      %v1345 = vadd.f32 %v1344, %v1282
      %v1346 = vadd.f32 %v1345, %v1283
      %v1347 = vadd.f32 %v1346, %v1284
      %v1348 = vadd.f32 %v1347, %v1285
      %v1349 = vadd.f32 %v1348, %v1286
      %v1350 = vadd.f32 %v1349, %v1287
      %v1351 = vadd.f32 %v1350, %v1288
      %v1352 = vadd.f32 %v1351, %v1289
      %v1353 = vadd.f32 %v1352, %v1290
      %v1354 = vadd.f32 %v1353, %v1291
      %v1355 = vadd.f32 %v1354, %v1292
      %v1356 = vadd.f32 %v1355, %v1293
      %v1357 = vadd.f32 %v1356, %v1294
      %v1358 = vadd.f32 %v1357, %v1295
      %v1359 = vadd.f32 %v1358, %v1296
      %v1360 = vadd.f32 %v1359, %v1297
      %v1361 = vadd.f32 %v1360, %v1298
      %v1362 = vadd.f32 %v1361, %v1299
      %v1363 = vadd.f32 %v1362, %v1300
      %v1364 = vadd.f32 %v1363, %v1301
      %v1365 = vadd.f32 %v1364, %v1302
      %v1366 = vadd.f32 %v1365, %v1303
      %v1367 = vadd.f32 %v1366, %v1304
      %v1368 = vadd.f32 %v1367, %v1305
      %v1369 = vadd.f32 %v1368, %v1306
      %v1370 = vadd.f32 %v1369, %v1307
      %v1371 = vadd.f32 %v1370, %v1308
      %v1372 = vadd.f32 %v1371, %v1309
      %v1373 = vadd.f32 %v1372, %v1310
      %v1374 = vadd.f32 %v1373, %v1311
      %v1375 = vadd.f32 %v1374, %v1312
      %v1376 = vadd.f32 %v1375, %v1313
      %v1377 = vadd.f32 %v1376, %v1314
      %v1378 = vadd.f32 %v1377, %v1315
      %v1379 = vadd.f32 %v1378, %v1316
      %v1380 = vrot.slane %v1379, 4
      %v1381 = vadd.f32 %v1379, %v1380
      %v1382 = vrot.slane %v1381, 2
      %v1383 = vadd.f32 %v1381, %v1382
      %v1384 = vrot.slane %v1383, 1
      %v1385 = vadd.f32 %v1383, %v1384
      %1386 = vst [vmem:[%s229 + $0x1] sm:$0x1] %v1385
      %s1387 = smul.u32 64, %s19
      %p1388 = scmp.lt.s32.totalorder %s1387, 127
      %s1389 = scalar_select %p1388, %s1387, 127
      %s1390 = smul.addr %s1389, 4
      %s1391 = scalar_lea.vmem %s2, %s1390
      %p1392 = scmp.lt.s32.totalorder %s19, 1
      %s1393 = scalar_select %p1392, %s19, 1
      %s1394 = smul.addr %s1393, 2
      %s1395 = scalar_lea.vmem %s3, %s1394
      // Predicated region
      $region29: #{cnn_add_margin_forward.3} parent=27 // pred_check
        %p1396 = pneg %p99
      $region30: #{cnn_add_margin_forward.3} parent=27 // pred_check_branch
        %1398 = sbr.rel (%p1396) target = $region32
      $region31: #{cnn_add_margin_forward.3} parent=27 // pred_region
        %s1399 = smul.u32 64, %s19
      $region32: #{cnn_add_margin_forward.3} parent=27 // pred_fallthru
        _
      // Predicated region
      $region33: #{cnn_add_margin_forward.3} parent=27 // pred_check
        %p1400 = pneg %p125
      $region34: #{cnn_add_margin_forward.3} parent=27 // pred_check_branch
        %1402 = sbr.rel (%p1400) target = $region36
      $region35: #{cnn_add_margin_forward.3} parent=27 // pred_region
        _
      $region36: #{cnn_add_margin_forward.3} parent=27 // pred_fallthru
        _
    $region28: #{cnn_add_margin_forward.3} parent=5 // pred_fallthru
      _
    %p1403 = scmp.le.s32.totalorder 2, %s10
    // Predicated region
    $region37: #{cnn_add_margin_forward.3} parent=5 // pred_check
      %p1404 = pneg %p1403
    $region38: #{cnn_add_margin_forward.3} parent=5 // pred_check_branch
      %1406 = sbr.rel (%p1404) target = $region40
    $region39: #{cnn_add_margin_forward.3} parent=5 // pred_region
      %s1407 = ssub.s32 %s10, 2
      // Predicated region
      $region41: #{cnn_add_margin_forward.3} parent=39 // pred_check
        %p1408 = pneg %p105
      $region42: #{cnn_add_margin_forward.3} parent=39 // pred_check_branch
        %1410 = sbr.rel (%p1408) target = $region44
      $region43: #{cnn_add_margin_forward.3} parent=39 // pred_region
        %s1411 = smul.u32 64, %s21
        %p1412 = scmp.lt.s32.totalorder %s1411, 127
        %s1413 = scalar_select %p1412, %s1411, 127
        %s1414 = smul.addr %s1413, 4
        %s1415 = scalar_lea.vmem %s2, %s1414
      $region44: #{cnn_add_margin_forward.3} parent=39 // pred_fallthru
        _
      // Predicated region
      $region45: #{cnn_add_margin_forward.3} parent=39 // pred_check
        %p1416 = pneg %p131
      $region46: #{cnn_add_margin_forward.3} parent=39 // pred_check_branch
        %1418 = sbr.rel (%p1416) target = $region48
      $region47: #{cnn_add_margin_forward.3} parent=39 // pred_region
        %p1419 = scmp.lt.s32.totalorder %s21, 1
        %s1420 = scalar_select %p1419, %s21, 1
        %s1421 = smul.addr %s1420, 2
        %s1422 = scalar_lea.vmem %s3, %s1421
      $region48: #{cnn_add_margin_forward.3} parent=39 // pred_fallthru
        _
    $region40: #{cnn_add_margin_forward.3} parent=5 // pred_fallthru
      _
  $region6: #{cnn_add_margin_forward.3} parent=0 // loop_footer
    %s14 = sadd.s32 1, %s10
  $region7: #{cnn_add_margin_forward.3} parent=0 // loop_footer_branch
    %9 = sbr.rel target = $region3
  $region8: #{cnn_add_margin_forward.3} parent=0 // loop_exit
    _

// kernel: cnn_add_margin_forward.5
$region0: #{cnn_add_margin_forward.5}
  #allocation0 [shape = 'u32[]', space=smem, size = 0x4, offset = 0x4, fixed_abs, tag = 'smem constant byte address 0x4 - core index']
  #allocation1 [shape = 'u32[144,128]{1,0:T(1,128)}', space=vmem, size = 0x12000, scoped, tag = 'internal scratch']
  %s0 = inlined_call_operand.vmem [shape: bf16[4,128], index: 0, kind: input, shape index: {}]
  %s1 = inlined_call_operand.vmem [shape: f32[1024,128], index: 1, kind: input, shape index: {}]
  %s2 = inlined_call_operand.vmem [shape: s32[4,1], index: 2, kind: input, shape index: {}]
  %s3 = inlined_call_operand.hbm [shape: f32[4,1024], index: 3, kind: output, shape index: {}]
  %s4 = sld [smem:[#allocation0]]
  $region45: #{cnn_add_margin_forward.5} parent=0
    _
  %s6 = ssub.s32 1, %s4
  %s7 = scalar_select 0, %s6, %s4
  $region1: #{cnn_add_margin_forward.5} parent=0
    #allocation2 [shape = 'u8[16384]{0}', space=vmem, size = 0x4000, scoped, tag = 'output window, operand 0']
    #allocation3 [shape = 's32[2]{0}', space=sflag, size = 0x8, scoped, tag = 'scoped memory for cnn_add_margin_forward.5']
    %8 = vsyncpa [#allocation3], 0
    %s9 = scalar_lea.sflag [#allocation3], 1
    %10 = vsyncpa %s9, 0
    loop: start=0, step=1, limit=4
    $region2: #{cnn_add_margin_forward.5} parent=1 // loop_pre_header
      _
    $region3: #{cnn_add_margin_forward.5} parent=1 // loop_header
      %s12 = sphi 0, %s16
      %p13 = scmp.ge.s32.totalorder %s12, 4
      %s20 = sphi 0, %s20
      %s22 = sphi 0, %s20
      %s23 = sphi 0, %s22
      %s37 = sphi 0, %s23
      %s43 = sphi 0, %s45
      %s46 = sphi 0, %s43
      %s47 = sphi 0, %s46
      %s63 = sphi 0, %s47
      %s67 = sphi 0, %s67
      %s69 = sphi 0, %s67
      %s70 = sphi 0, %s69
      %s84 = sphi 0, %s70
      %s90 = sphi 0, %s92
      %s93 = sphi 0, %s90
      %s94 = sphi 0, %s93
      %s110 = sphi 0, %s94
    $region4: #{cnn_add_margin_forward.5} parent=1 // loop_header_branch
      %15 = sbr.rel (%p13) target = $region8
    $region5: #{cnn_add_margin_forward.5} parent=1 // loop_body
      %s17 = ssub.s32 %s12, 1
      %s18 = ssub.s32 %s12, 2
      %s19 = sadd.s32 %s12, 1
      %s21 = sadd.s32 %s20, 1
      %p24 = scmp.eq.s32.totalorder %s12, 1
      %p25 = scmp.ne.s32.totalorder %s20, %s22
      %p26 = scmp.eq.s32.totalorder %s12, 0
      %p27 = por %p25, %p26
      %p28 = scmp.ne.s32.totalorder %s20, %s22
      %p29 = scmp.eq.s32.totalorder %s17, 1
      %p30 = por %p28, %p29
      %p31 = scmp.ne.s32.totalorder %s22, %s23
      %p32 = scmp.eq.s32.totalorder %s17, 0
      %p33 = por %p31, %p32
      %p34 = scmp.ne.s32.totalorder %s22, %s23
      %p35 = scmp.eq.s32.totalorder %s18, 1
      %p36 = por %p34, %p35
      %p38 = scmp.ne.s32.totalorder %s23, %s37
      %p39 = scmp.eq.s32.totalorder %s18, 0
      %p40 = por %p38, %p39
      %s41 = ssub.s32 %s12, %s19
      %p42 = scmp.eq.s32.totalorder %s41, 0
      %s44 = sadd.s32 %s43, 1
      %s45 = scalar_select %p42, %s43, %s44
      %p48 = pneg %p42
      %p49 = scmp.eq.s32.totalorder %s12, 1
      %p50 = por %p48, %p49
      %p51 = scmp.ne.s32.totalorder %s43, %s46
      %p52 = scmp.eq.s32.totalorder %s12, 0
      %p53 = por %p51, %p52
      %p54 = scmp.ne.s32.totalorder %s43, %s46
      %p55 = scmp.eq.s32.totalorder %s17, 1
      %p56 = por %p54, %p55
      %p57 = scmp.ne.s32.totalorder %s46, %s47
      %p58 = scmp.eq.s32.totalorder %s17, 0
      %p59 = por %p57, %p58
      %p60 = scmp.ne.s32.totalorder %s46, %s47
      %p61 = scmp.eq.s32.totalorder %s18, 1
      %p62 = por %p60, %p61
      %p64 = scmp.ne.s32.totalorder %s47, %s63
      %p65 = scmp.eq.s32.totalorder %s18, 0
      %p66 = por %p64, %p65
      %s68 = sadd.s32 %s67, 1
      %p71 = scmp.eq.s32.totalorder %s12, 1
      %p72 = scmp.ne.s32.totalorder %s67, %s69
      %p73 = scmp.eq.s32.totalorder %s12, 0
      %p74 = por %p72, %p73
      %p75 = scmp.ne.s32.totalorder %s67, %s69
      %p76 = scmp.eq.s32.totalorder %s17, 1
      %p77 = por %p75, %p76
      %p78 = scmp.ne.s32.totalorder %s69, %s70
      %p79 = scmp.eq.s32.totalorder %s17, 0
      %p80 = por %p78, %p79
      %p81 = scmp.ne.s32.totalorder %s69, %s70
      %p82 = scmp.eq.s32.totalorder %s18, 1
      %p83 = por %p81, %p82
      %p85 = scmp.ne.s32.totalorder %s70, %s84
      %p86 = scmp.eq.s32.totalorder %s18, 0
      %p87 = por %p85, %p86
      %s88 = ssub.s32 %s12, %s19
      %p89 = scmp.eq.s32.totalorder %s88, 0
      %s91 = sadd.s32 %s90, 1
      %s92 = scalar_select %p89, %s90, %s91
      %p95 = pneg %p89
      %p96 = scmp.eq.s32.totalorder %s12, 1
      %p97 = por %p95, %p96
      %p98 = scmp.ne.s32.totalorder %s90, %s93
      %p99 = scmp.eq.s32.totalorder %s12, 0
      %p100 = por %p98, %p99
      %p101 = scmp.ne.s32.totalorder %s90, %s93
      %p102 = scmp.eq.s32.totalorder %s17, 1
      %p103 = por %p101, %p102
      %p104 = scmp.ne.s32.totalorder %s93, %s94
      %p105 = scmp.eq.s32.totalorder %s17, 0
      %p106 = por %p104, %p105
      %p107 = scmp.ne.s32.totalorder %s93, %s94
      %p108 = scmp.eq.s32.totalorder %s18, 1
      %p109 = por %p107, %p108
      %p111 = scmp.ne.s32.totalorder %s94, %s110
      %p112 = scmp.eq.s32.totalorder %s18, 0
      %p113 = por %p111, %p112
      %p114 = scmp.le.s32.totalorder 1, %s12
      %p115 = scmp.lt.s32.totalorder %s12, 3
      %p116 = pnand %p114, %p115
      %p117 = pneg %p116
      // Predicated region
      $region9: #{cnn_add_margin_forward.5} parent=5 // pred_check
        _
      $region10: #{cnn_add_margin_forward.5} parent=5 // pred_check_branch
        %119 = sbr.rel (%p116) target = $region12
      $region11: #{cnn_add_margin_forward.5} parent=5 // pred_region
        %s120 = ssub.s32 %s12, 1
        // Predicated region
        $region13: #{cnn_add_margin_forward.5} parent=11 // pred_check
          %p121 = pneg %p33
        $region14: #{cnn_add_margin_forward.5} parent=11 // pred_check_branch
          %123 = sbr.rel (%p121) target = $region16
        $region15: #{cnn_add_margin_forward.5} parent=11 // pred_region
          _
        $region16: #{cnn_add_margin_forward.5} parent=11 // pred_fallthru
          _
        // Predicated region
        $region17: #{cnn_add_margin_forward.5} parent=11 // pred_check
          %p124 = pneg %p80
        $region18: #{cnn_add_margin_forward.5} parent=11 // pred_check_branch
          %126 = sbr.rel (%p124) target = $region20
        $region19: #{cnn_add_margin_forward.5} parent=11 // pred_region
          _
        $region20: #{cnn_add_margin_forward.5} parent=11 // pred_fallthru
          _
      $region12: #{cnn_add_margin_forward.5} parent=5 // pred_fallthru
        _
      %p127 = scmp.lt.s32.totalorder %s12, 2
      // Predicated region
      $region21: #{cnn_add_margin_forward.5} parent=5 // pred_check
        %p128 = pneg %p127
      $region22: #{cnn_add_margin_forward.5} parent=5 // pred_check_branch
        %130 = sbr.rel (%p128) target = $region24
      $region23: #{cnn_add_margin_forward.5} parent=5 // pred_region
        // Predicated region
        $region25: #{cnn_add_margin_forward.5} parent=23 // pred_check
          %p131 = pneg %p53
        $region26: #{cnn_add_margin_forward.5} parent=23 // pred_check_branch
          %133 = sbr.rel (%p131) target = $region28
        $region27: #{cnn_add_margin_forward.5} parent=23 // pred_region
          %s134 = smul.u32 64, %s12
          %p135 = scmp.lt.s32.totalorder %s134, 127
          %s136 = scalar_select %p135, %s134, 127
          %s137 = smul.addr %s136, 8
          %s138 = scalar_lea.vmem %s1, %s137
          %s139 = smul.u32 64, %s12
        $region28: #{cnn_add_margin_forward.5} parent=23 // pred_fallthru
          _
      $region24: #{cnn_add_margin_forward.5} parent=5 // pred_fallthru
        _
      %p140 = scmp.le.s32.totalorder 1, %s12
      %p141 = scmp.lt.s32.totalorder %s12, 3
      %p142 = pnand %p140, %p141
      %p143 = pneg %p142
      // Predicated region
      $region29: #{cnn_add_margin_forward.5} parent=5 // pred_check
        _
      $region30: #{cnn_add_margin_forward.5} parent=5 // pred_check_branch
        %145 = sbr.rel (%p142) target = $region32
      $region31: #{cnn_add_margin_forward.5} parent=5 // pred_region
        %s146 = ssub.s32 %s12, 1
        %p147 = pneg %p33
        %p148 = pneg %p30
        %s149 = smul.u32 64, %s17
        %p150 = scmp.lt.s32.totalorder %s149, 127
        %s151 = scalar_select %p150, %s149, 127
        %s152 = smul.addr %s151, 8
        %s153 = scalar_lea.vmem %s1, %s152
        %p154 = pneg %p59
        %p155 = pneg %p56
        %p156 = pneg %p80
        %p157 = pneg %p77
        %p158 = pneg %p106
        %p159 = pneg %p103
        %s160 = sand.u32 %s93, 1
        %s161 = scalar_lea.sflag [#allocation3], %s160
        %s162 = sand.u32 %s93, 1
        %s163 = smul.addr %s162, 16
        %s164 = scalar_lea.vmem [#allocation2], %s163
        %s165 = smul.u32 64, %s17
        %p166 = scmp.lt.s32.totalorder %s165, 127
        %s167 = scalar_select %p166, %s165, 127
        %s168 = smul.addr %s167, 8
        %s169 = scalar_lea.vmem %s1, %s168
        %s170 = smul.u32 64, %s17
        %s171 = smul.u32 4, %s17
        %v173 = vld [vmem:[%s169] sm:$0xff]
        %v174 = vld [vmem:[%s169 + $0x8] sm:$0xff]
        %v175 = vld [vmem:[%s169 + $0x10] sm:$0xff]
        %v176 = vld [vmem:[%s169 + $0x18] sm:$0xff]
        %v177 = vld [vmem:[%s169 + $0x20] sm:$0xff]
        %v178 = vld [vmem:[%s169 + $0x28] sm:$0xff]
        %v179 = vld [vmem:[%s169 + $0x30] sm:$0xff]
        %v180 = vld [vmem:[%s169 + $0x38] sm:$0xff]
        %v181 = vld [vmem:[%s169 + $0x40] sm:$0xff]
        %v182 = vld [vmem:[%s169 + $0x48] sm:$0xff]
        %v183 = vld [vmem:[%s169 + $0x50] sm:$0xff]
        %v184 = vld [vmem:[%s169 + $0x58] sm:$0xff]
        %v185 = vld [vmem:[%s169 + $0x60] sm:$0xff]
        %v186 = vld [vmem:[%s169 + $0x68] sm:$0xff]
        %v187 = vld [vmem:[%s169 + $0x70] sm:$0xff]
        %v188 = vld [vmem:[%s169 + $0x78] sm:$0xff]
        %v189 = vld [vmem:[%s169 + $0x80] sm:$0xff]
        %v190 = vld [vmem:[%s169 + $0x88] sm:$0xff]
        %v191 = vld [vmem:[%s169 + $0x90] sm:$0xff]
        %v192 = vld [vmem:[%s169 + $0x98] sm:$0xff]
        %v193 = vld [vmem:[%s169 + $0xa0] sm:$0xff]
        %v194 = vld [vmem:[%s169 + $0xa8] sm:$0xff]
        %v195 = vld [vmem:[%s169 + $0xb0] sm:$0xff]
        %v196 = vld [vmem:[%s169 + $0xb8] sm:$0xff]
        %v197 = vld [vmem:[%s169 + $0xc0] sm:$0xff]
        %v198 = vld [vmem:[%s169 + $0xc8] sm:$0xff]
        %v199 = vld [vmem:[%s169 + $0xd0] sm:$0xff]
        %v200 = vld [vmem:[%s169 + $0xd8] sm:$0xff]
        %v201 = vld [vmem:[%s169 + $0xe0] sm:$0xff]
        %v202 = vld [vmem:[%s169 + $0xe8] sm:$0xff]
        %v203 = vld [vmem:[%s169 + $0xf0] sm:$0xff]
        %v204 = vld [vmem:[%s169 + $0xf8] sm:$0xff]
        %v205 = vld [vmem:[%s169 + $0x100] sm:$0xff]
        %v206 = vld [vmem:[%s169 + $0x108] sm:$0xff]
        %v207 = vld [vmem:[%s169 + $0x110] sm:$0xff]
        %v208 = vld [vmem:[%s169 + $0x118] sm:$0xff]
        %v209 = vld [vmem:[%s169 + $0x120] sm:$0xff]
        %v210 = vld [vmem:[%s169 + $0x128] sm:$0xff]
        %v211 = vld [vmem:[%s169 + $0x130] sm:$0xff]
        %v212 = vld [vmem:[%s169 + $0x138] sm:$0xff]
        %v213 = vld [vmem:[%s169 + $0x140] sm:$0xff]
        %v214 = vld [vmem:[%s169 + $0x148] sm:$0xff]
        %v215 = vld [vmem:[%s169 + $0x150] sm:$0xff]
        %v216 = vld [vmem:[%s169 + $0x158] sm:$0xff]
        %v217 = vld [vmem:[%s169 + $0x160] sm:$0xff]
        %v218 = vld [vmem:[%s169 + $0x168] sm:$0xff]
        %v219 = vld [vmem:[%s169 + $0x170] sm:$0xff]
        %v220 = vld [vmem:[%s169 + $0x178] sm:$0xff]
        %v221 = vld [vmem:[%s169 + $0x180] sm:$0xff]
        %v222 = vld [vmem:[%s169 + $0x188] sm:$0xff]
        %v223 = vld [vmem:[%s169 + $0x190] sm:$0xff]
        %v224 = vld [vmem:[%s169 + $0x198] sm:$0xff]
        %v225 = vld [vmem:[%s169 + $0x1a0] sm:$0xff]
        %v226 = vld [vmem:[%s169 + $0x1a8] sm:$0xff]
        %v227 = vld [vmem:[%s169 + $0x1b0] sm:$0xff]
        %v228 = vld [vmem:[%s169 + $0x1b8] sm:$0xff]
        %v229 = vld [vmem:[%s169 + $0x1c0] sm:$0xff]
        %v230 = vld [vmem:[%s169 + $0x1c8] sm:$0xff]
        %v231 = vld [vmem:[%s169 + $0x1d0] sm:$0xff]
        %v232 = vld [vmem:[%s169 + $0x1d8] sm:$0xff]
        %v233 = vld [vmem:[%s169 + $0x1e0] sm:$0xff]
        %v234 = vld [vmem:[%s169 + $0x1e8] sm:$0xff]
        %v235 = vld [vmem:[%s169 + $0x1f0] sm:$0xff]
        %v236 = vld [vmem:[%s169 + $0x1f8] sm:$0xff]
        %v237 = vmul.f32 %v173, %v173
        %v238 = vmul.f32 %v174, %v174
        %v239 = vmul.f32 %v175, %v175
        %v240 = vmul.f32 %v176, %v176
        %v241 = vmul.f32 %v177, %v177
        %v242 = vmul.f32 %v178, %v178
        %v243 = vmul.f32 %v179, %v179
        %v244 = vmul.f32 %v180, %v180
        %v245 = vmul.f32 %v181, %v181
        %v246 = vmul.f32 %v182, %v182
        %v247 = vmul.f32 %v183, %v183
        %v248 = vmul.f32 %v184, %v184
        %v249 = vmul.f32 %v185, %v185
        %v250 = vmul.f32 %v186, %v186
        %v251 = vmul.f32 %v187, %v187
        %v252 = vmul.f32 %v188, %v188
        %v253 = vmul.f32 %v189, %v189
        %v254 = vmul.f32 %v190, %v190
        %v255 = vmul.f32 %v191, %v191
        %v256 = vmul.f32 %v192, %v192
        %v257 = vmul.f32 %v193, %v193
        %v258 = vmul.f32 %v194, %v194
        %v259 = vmul.f32 %v195, %v195
        %v260 = vmul.f32 %v196, %v196
        %v261 = vmul.f32 %v197, %v197
        %v262 = vmul.f32 %v198, %v198
        %v263 = vmul.f32 %v199, %v199
        %v264 = vmul.f32 %v200, %v200
        %v265 = vmul.f32 %v201, %v201
        %v266 = vmul.f32 %v202, %v202
        %v267 = vmul.f32 %v203, %v203
        %v268 = vmul.f32 %v204, %v204
        %v269 = vmul.f32 %v205, %v205
        %v270 = vmul.f32 %v206, %v206
        %v271 = vmul.f32 %v207, %v207
        %v272 = vmul.f32 %v208, %v208
        %v273 = vmul.f32 %v209, %v209
        %v274 = vmul.f32 %v210, %v210
        %v275 = vmul.f32 %v211, %v211
        %v276 = vmul.f32 %v212, %v212
        %v277 = vmul.f32 %v213, %v213
        %v278 = vmul.f32 %v214, %v214
        %v279 = vmul.f32 %v215, %v215
        %v280 = vmul.f32 %v216, %v216
        %v281 = vmul.f32 %v217, %v217
        %v282 = vmul.f32 %v218, %v218
        %v283 = vmul.f32 %v219, %v219
        %v284 = vmul.f32 %v220, %v220
        %v285 = vmul.f32 %v221, %v221
        %v286 = vmul.f32 %v222, %v222
        %v287 = vmul.f32 %v223, %v223
        %v288 = vmul.f32 %v224, %v224
        %v289 = vmul.f32 %v225, %v225
        %v290 = vmul.f32 %v226, %v226
        %v291 = vmul.f32 %v227, %v227
        %v292 = vmul.f32 %v228, %v228
        %v293 = vmul.f32 %v229, %v229
        %v294 = vmul.f32 %v230, %v230
        %v295 = vmul.f32 %v231, %v231
        %v296 = vmul.f32 %v232, %v232
        %v297 = vmul.f32 %v233, %v233
        %v298 = vmul.f32 %v234, %v234
        %v299 = vmul.f32 %v235, %v235
        %v300 = vmul.f32 %v236, %v236
        %301 = vadd.xlane.f32.xlu0 %v237
        %v302 = vpop.xlane.xlu0 %301
        %303 = vadd.xlane.f32.xlu0 %v238
        %v304 = vpop.xlane.xlu0 %303
        %305 = vadd.xlane.f32.xlu0 %v239
        %v306 = vpop.xlane.xlu0 %305
        %307 = vadd.xlane.f32.xlu0 %v240
        %v308 = vpop.xlane.xlu0 %307
        %309 = vadd.xlane.f32.xlu0 %v241
        %v310 = vpop.xlane.xlu0 %309
        %311 = vadd.xlane.f32.xlu0 %v242
        %v312 = vpop.xlane.xlu0 %311
        %313 = vadd.xlane.f32.xlu0 %v243
        %v314 = vpop.xlane.xlu0 %313
        %315 = vadd.xlane.f32.xlu0 %v244
        %v316 = vpop.xlane.xlu0 %315
        %317 = vadd.xlane.f32.xlu0 %v245
        %v318 = vpop.xlane.xlu0 %317
        %319 = vadd.xlane.f32.xlu0 %v246
        %v320 = vpop.xlane.xlu0 %319
        %321 = vadd.xlane.f32.xlu0 %v247
        %v322 = vpop.xlane.xlu0 %321
        %323 = vadd.xlane.f32.xlu0 %v248
        %v324 = vpop.xlane.xlu0 %323
        %325 = vadd.xlane.f32.xlu0 %v249
        %v326 = vpop.xlane.xlu0 %325
        %327 = vadd.xlane.f32.xlu0 %v250
        %v328 = vpop.xlane.xlu0 %327
        %329 = vadd.xlane.f32.xlu0 %v251
        %v330 = vpop.xlane.xlu0 %329
        %331 = vadd.xlane.f32.xlu0 %v252
        %v332 = vpop.xlane.xlu0 %331
        %333 = vadd.xlane.f32.xlu0 %v253
        %v334 = vpop.xlane.xlu0 %333
        %335 = vadd.xlane.f32.xlu0 %v254
        %v336 = vpop.xlane.xlu0 %335
        %337 = vadd.xlane.f32.xlu0 %v255
        %v338 = vpop.xlane.xlu0 %337
        %339 = vadd.xlane.f32.xlu0 %v256
        %v340 = vpop.xlane.xlu0 %339
        %341 = vadd.xlane.f32.xlu0 %v257
        %v342 = vpop.xlane.xlu0 %341
        %343 = vadd.xlane.f32.xlu0 %v258
        %v344 = vpop.xlane.xlu0 %343
        %345 = vadd.xlane.f32.xlu0 %v259
        %v346 = vpop.xlane.xlu0 %345
        %347 = vadd.xlane.f32.xlu0 %v260
        %v348 = vpop.xlane.xlu0 %347
        %349 = vadd.xlane.f32.xlu0 %v261
        %v350 = vpop.xlane.xlu0 %349
        %351 = vadd.xlane.f32.xlu0 %v262
        %v352 = vpop.xlane.xlu0 %351
        %353 = vadd.xlane.f32.xlu0 %v263
        %v354 = vpop.xlane.xlu0 %353
        %355 = vadd.xlane.f32.xlu0 %v264
        %v356 = vpop.xlane.xlu0 %355
        %357 = vadd.xlane.f32.xlu0 %v265
        %v358 = vpop.xlane.xlu0 %357
        %359 = vadd.xlane.f32.xlu0 %v266
        %v360 = vpop.xlane.xlu0 %359
        %361 = vadd.xlane.f32.xlu0 %v267
        %v362 = vpop.xlane.xlu0 %361
        %363 = vadd.xlane.f32.xlu0 %v268
        %v364 = vpop.xlane.xlu0 %363
        %365 = vadd.xlane.f32.xlu0 %v269
        %v366 = vpop.xlane.xlu0 %365
        %367 = vadd.xlane.f32.xlu0 %v270
        %v368 = vpop.xlane.xlu0 %367
        %369 = vadd.xlane.f32.xlu0 %v271
        %v370 = vpop.xlane.xlu0 %369
        %371 = vadd.xlane.f32.xlu0 %v272
        %v372 = vpop.xlane.xlu0 %371
        %373 = vadd.xlane.f32.xlu0 %v273
        %v374 = vpop.xlane.xlu0 %373
        %375 = vadd.xlane.f32.xlu0 %v274
        %v376 = vpop.xlane.xlu0 %375
        %377 = vadd.xlane.f32.xlu0 %v275
        %v378 = vpop.xlane.xlu0 %377
        %379 = vadd.xlane.f32.xlu0 %v276
        %v380 = vpop.xlane.xlu0 %379
        %381 = vadd.xlane.f32.xlu0 %v277
        %v382 = vpop.xlane.xlu0 %381
        %383 = vadd.xlane.f32.xlu0 %v278
        %v384 = vpop.xlane.xlu0 %383
        %385 = vadd.xlane.f32.xlu0 %v279
        %v386 = vpop.xlane.xlu0 %385
        %387 = vadd.xlane.f32.xlu0 %v280
        %v388 = vpop.xlane.xlu0 %387
        %389 = vadd.xlane.f32.xlu0 %v281
        %v390 = vpop.xlane.xlu0 %389
        %391 = vadd.xlane.f32.xlu0 %v282
        %v392 = vpop.xlane.xlu0 %391
        %393 = vadd.xlane.f32.xlu0 %v283
        %v394 = vpop.xlane.xlu0 %393
        %395 = vadd.xlane.f32.xlu0 %v284
        %v396 = vpop.xlane.xlu0 %395
        %397 = vadd.xlane.f32.xlu0 %v285
        %v398 = vpop.xlane.xlu0 %397
        %399 = vadd.xlane.f32.xlu0 %v286
        %v400 = vpop.xlane.xlu0 %399
        %401 = vadd.xlane.f32.xlu0 %v287
        %v402 = vpop.xlane.xlu0 %401
        %403 = vadd.xlane.f32.xlu0 %v288
        %v404 = vpop.xlane.xlu0 %403
        %405 = vadd.xlane.f32.xlu0 %v289
        %v406 = vpop.xlane.xlu0 %405
        %407 = vadd.xlane.f32.xlu0 %v290
        %v408 = vpop.xlane.xlu0 %407
        %409 = vadd.xlane.f32.xlu0 %v291
        %v410 = vpop.xlane.xlu0 %409
        %411 = vadd.xlane.f32.xlu0 %v292
        %v412 = vpop.xlane.xlu0 %411
        %413 = vadd.xlane.f32.xlu0 %v293
        %v414 = vpop.xlane.xlu0 %413
        %415 = vadd.xlane.f32.xlu0 %v294
        %v416 = vpop.xlane.xlu0 %415
        %417 = vadd.xlane.f32.xlu0 %v295
        %v418 = vpop.xlane.xlu0 %417
        %419 = vadd.xlane.f32.xlu0 %v296
        %v420 = vpop.xlane.xlu0 %419
        %421 = vadd.xlane.f32.xlu0 %v297
        %v422 = vpop.xlane.xlu0 %421
        %423 = vadd.xlane.f32.xlu0 %v298
        %v424 = vpop.xlane.xlu0 %423
        %425 = vadd.xlane.f32.xlu0 %v299
        %v426 = vpop.xlane.xlu0 %425
        %427 = vadd.xlane.f32.xlu0 %v300
        %v428 = vpop.xlane.xlu0 %427
        %v429 = vmax.f32 %v302, 1e-24
        %v430 = vmax.f32 %v304, 1e-24
        %v431 = vmax.f32 %v306, 1e-24
        %v432 = vmax.f32 %v308, 1e-24
        %v433 = vmax.f32 %v310, 1e-24
        %v434 = vmax.f32 %v312, 1e-24
        %v435 = vmax.f32 %v314, 1e-24
        %v436 = vmax.f32 %v316, 1e-24
        %v437 = vmax.f32 %v318, 1e-24
        %v438 = vmax.f32 %v320, 1e-24
        %v439 = vmax.f32 %v322, 1e-24
        %v440 = vmax.f32 %v324, 1e-24
        %v441 = vmax.f32 %v326, 1e-24
        %v442 = vmax.f32 %v328, 1e-24
        %v443 = vmax.f32 %v330, 1e-24
        %v444 = vmax.f32 %v332, 1e-24
        %v445 = vmax.f32 %v334, 1e-24
        %v446 = vmax.f32 %v336, 1e-24
        %v447 = vmax.f32 %v338, 1e-24
        %v448 = vmax.f32 %v340, 1e-24
        %v449 = vmax.f32 %v342, 1e-24
        %v450 = vmax.f32 %v344, 1e-24
        %v451 = vmax.f32 %v346, 1e-24
        %v452 = vmax.f32 %v348, 1e-24
        %v453 = vmax.f32 %v350, 1e-24
        %v454 = vmax.f32 %v352, 1e-24
        %v455 = vmax.f32 %v354, 1e-24
        %v456 = vmax.f32 %v356, 1e-24
        %v457 = vmax.f32 %v358, 1e-24
        %v458 = vmax.f32 %v360, 1e-24
        %v459 = vmax.f32 %v362, 1e-24
        %v460 = vmax.f32 %v364, 1e-24
        %v461 = vmax.f32 %v366, 1e-24
        %v462 = vmax.f32 %v368, 1e-24
        %v463 = vmax.f32 %v370, 1e-24
        %v464 = vmax.f32 %v372, 1e-24
        %v465 = vmax.f32 %v374, 1e-24
        %v466 = vmax.f32 %v376, 1e-24
        %v467 = vmax.f32 %v378, 1e-24
        %v468 = vmax.f32 %v380, 1e-24
        %v469 = vmax.f32 %v382, 1e-24
        %v470 = vmax.f32 %v384, 1e-24
        %v471 = vmax.f32 %v386, 1e-24
        %v472 = vmax.f32 %v388, 1e-24
        %v473 = vmax.f32 %v390, 1e-24
        %v474 = vmax.f32 %v392, 1e-24
        %v475 = vmax.f32 %v394, 1e-24
        %v476 = vmax.f32 %v396, 1e-24
        %v477 = vmax.f32 %v398, 1e-24
        %v478 = vmax.f32 %v400, 1e-24
        %v479 = vmax.f32 %v402, 1e-24
        %v480 = vmax.f32 %v404, 1e-24
        %v481 = vmax.f32 %v406, 1e-24
        %v482 = vmax.f32 %v408, 1e-24
        %v483 = vmax.f32 %v410, 1e-24
        %v484 = vmax.f32 %v412, 1e-24
        %v485 = vmax.f32 %v414, 1e-24
        %v486 = vmax.f32 %v416, 1e-24
        %v487 = vmax.f32 %v418, 1e-24
        %v488 = vmax.f32 %v420, 1e-24
        %v489 = vmax.f32 %v422, 1e-24
        %v490 = vmax.f32 %v424, 1e-24
        %v491 = vmax.f32 %v426, 1e-24
        %v492 = vmax.f32 %v428, 1e-24
        %v493 = vrsqrt.pop %v429
        %v494 = vrsqrt.pop %v430
        %v495 = vrsqrt.pop %v431
        %v496 = vrsqrt.pop %v432
        %v497 = vrsqrt.pop %v433
        %v498 = vrsqrt.pop %v434
        %v499 = vrsqrt.pop %v435
        %v500 = vrsqrt.pop %v436
        %v501 = vrsqrt.pop %v437
        %v502 = vrsqrt.pop %v438
        %v503 = vrsqrt.pop %v439
        %v504 = vrsqrt.pop %v440
        %v505 = vrsqrt.pop %v441
        %v506 = vrsqrt.pop %v442
        %v507 = vrsqrt.pop %v443
        %v508 = vrsqrt.pop %v444
        %v509 = vrsqrt.pop %v445
        %v510 = vrsqrt.pop %v446
        %v511 = vrsqrt.pop %v447
        %v512 = vrsqrt.pop %v448
        %v513 = vrsqrt.pop %v449
        %v514 = vrsqrt.pop %v450
        %v515 = vrsqrt.pop %v451
        %v516 = vrsqrt.pop %v452
        %v517 = vrsqrt.pop %v453
        %v518 = vrsqrt.pop %v454
        %v519 = vrsqrt.pop %v455
        %v520 = vrsqrt.pop %v456
        %v521 = vrsqrt.pop %v457
        %v522 = vrsqrt.pop %v458
        %v523 = vrsqrt.pop %v459
        %v524 = vrsqrt.pop %v460
        %v525 = vrsqrt.pop %v461
        %v526 = vrsqrt.pop %v462
        %v527 = vrsqrt.pop %v463
        %v528 = vrsqrt.pop %v464
        %v529 = vrsqrt.pop %v465
        %v530 = vrsqrt.pop %v466
        %v531 = vrsqrt.pop %v467
        %v532 = vrsqrt.pop %v468
        %v533 = vrsqrt.pop %v469
        %v534 = vrsqrt.pop %v470
        %v535 = vrsqrt.pop %v471
        %v536 = vrsqrt.pop %v472
        %v537 = vrsqrt.pop %v473
        %v538 = vrsqrt.pop %v474
        %v539 = vrsqrt.pop %v475
        %v540 = vrsqrt.pop %v476
        %v541 = vrsqrt.pop %v477
        %v542 = vrsqrt.pop %v478
        %v543 = vrsqrt.pop %v479
        %v544 = vrsqrt.pop %v480
        %v545 = vrsqrt.pop %v481
        %v546 = vrsqrt.pop %v482
        %v547 = vrsqrt.pop %v483
        %v548 = vrsqrt.pop %v484
        %v549 = vrsqrt.pop %v485
        %v550 = vrsqrt.pop %v486
        %v551 = vrsqrt.pop %v487
        %v552 = vrsqrt.pop %v488
        %v553 = vrsqrt.pop %v489
        %v554 = vrsqrt.pop %v490
        %v555 = vrsqrt.pop %v491
        %v556 = vrsqrt.pop %v492
        %v557 = vmul.f32 %v173, %v493
        %v558 = vmul.f32 %v174, %v494
        %v559 = vmul.f32 %v175, %v495
        %v560 = vmul.f32 %v176, %v496
        %v561 = vmul.f32 %v177, %v497
        %v562 = vmul.f32 %v178, %v498
        %v563 = vmul.f32 %v179, %v499
        %v564 = vmul.f32 %v180, %v500
        %v565 = vmul.f32 %v181, %v501
        %v566 = vmul.f32 %v182, %v502
        %v567 = vmul.f32 %v183, %v503
        %v568 = vmul.f32 %v184, %v504
        %v569 = vmul.f32 %v185, %v505
        %v570 = vmul.f32 %v186, %v506
        %v571 = vmul.f32 %v187, %v507
        %v572 = vmul.f32 %v188, %v508
        %v573 = vmul.f32 %v189, %v509
        %v574 = vmul.f32 %v190, %v510
        %v575 = vmul.f32 %v191, %v511
        %v576 = vmul.f32 %v192, %v512
        %v577 = vmul.f32 %v193, %v513
        %v578 = vmul.f32 %v194, %v514
        %v579 = vmul.f32 %v195, %v515
        %v580 = vmul.f32 %v196, %v516
        %v581 = vmul.f32 %v197, %v517
        %v582 = vmul.f32 %v198, %v518
        %v583 = vmul.f32 %v199, %v519
        %v584 = vmul.f32 %v200, %v520
        %v585 = vmul.f32 %v201, %v521
        %v586 = vmul.f32 %v202, %v522
        %v587 = vmul.f32 %v203, %v523
        %v588 = vmul.f32 %v204, %v524
        %v589 = vmul.f32 %v205, %v525
        %v590 = vmul.f32 %v206, %v526
        %v591 = vmul.f32 %v207, %v527
        %v592 = vmul.f32 %v208, %v528
        %v593 = vmul.f32 %v209, %v529
        %v594 = vmul.f32 %v210, %v530
        %v595 = vmul.f32 %v211, %v531
        %v596 = vmul.f32 %v212, %v532
        %v597 = vmul.f32 %v213, %v533
        %v598 = vmul.f32 %v214, %v534
        %v599 = vmul.f32 %v215, %v535
        %v600 = vmul.f32 %v216, %v536
        %v601 = vmul.f32 %v217, %v537
        %v602 = vmul.f32 %v218, %v538
        %v603 = vmul.f32 %v219, %v539
        %v604 = vmul.f32 %v220, %v540
        %v605 = vmul.f32 %v221, %v541
        %v606 = vmul.f32 %v222, %v542
        %v607 = vmul.f32 %v223, %v543
        %v608 = vmul.f32 %v224, %v544
        %v609 = vmul.f32 %v225, %v545
        %v610 = vmul.f32 %v226, %v546
        %v611 = vmul.f32 %v227, %v547
        %v612 = vmul.f32 %v228, %v548
        %v613 = vmul.f32 %v229, %v549
        %v614 = vmul.f32 %v230, %v550
        %v615 = vmul.f32 %v231, %v551
        %v616 = vmul.f32 %v232, %v552
        %v617 = vmul.f32 %v233, %v553
        %v618 = vmul.f32 %v234, %v554
        %v619 = vmul.f32 %v235, %v555
        %v620 = vmul.f32 %v236, %v556
        %v621 = vpack.c.bf16 %v558, %v557
        %v622 = vpack.c.bf16 %v560, %v559
        %v623 = vpack.c.bf16 %v562, %v561
        %v624 = vpack.c.bf16 %v564, %v563
        %v625 = vpack.c.bf16 %v566, %v565
        %v626 = vpack.c.bf16 %v568, %v567
        %v627 = vpack.c.bf16 %v570, %v569
        %v628 = vpack.c.bf16 %v572, %v571
        %v629 = vpack.c.bf16 %v574, %v573
        %v630 = vpack.c.bf16 %v576, %v575
        %v631 = vpack.c.bf16 %v578, %v577
        %v632 = vpack.c.bf16 %v580, %v579
        %v633 = vpack.c.bf16 %v582, %v581
        %v634 = vpack.c.bf16 %v584, %v583
        %v635 = vpack.c.bf16 %v586, %v585
        %v636 = vpack.c.bf16 %v588, %v587
        %v637 = vpack.c.bf16 %v590, %v589
        %v638 = vpack.c.bf16 %v592, %v591
        %v639 = vpack.c.bf16 %v594, %v593
        %v640 = vpack.c.bf16 %v596, %v595
        %v641 = vpack.c.bf16 %v598, %v597
        %v642 = vpack.c.bf16 %v600, %v599
        %v643 = vpack.c.bf16 %v602, %v601
        %v644 = vpack.c.bf16 %v604, %v603
        %v645 = vpack.c.bf16 %v606, %v605
        %v646 = vpack.c.bf16 %v608, %v607
        %v647 = vpack.c.bf16 %v610, %v609
        %v648 = vpack.c.bf16 %v612, %v611
        %v649 = vpack.c.bf16 %v614, %v613
        %v650 = vpack.c.bf16 %v616, %v615
        %v651 = vpack.c.bf16 %v618, %v617
        %v652 = vpack.c.bf16 %v620, %v619
        %v653 = vld [vmem:[%s0] sm:$0x3]
        %654 = vmatprep.subr.bf16.mxu0 0
        %655 = vmatpush1.bf16.xpose.msra.mxu0 %v621
        %656 = vmatprep.subr.bf16.mxu0 0
        %657 = vmatpush1.bf16.xpose.msra.mxu0 %v622
        %658 = vmatprep.subr.bf16.mxu0 0
        %659 = vmatpush1.bf16.xpose.msra.mxu0 %v623
        %660 = vmatprep.subr.bf16.mxu0 0
        %661 = vmatpush1.bf16.xpose.msra.mxu0 %v624
        %662 = vmatprep.subr.bf16.mxu0 0
        %663 = vmatpush1.bf16.xpose.msra.mxu0 %v625
        %664 = vmatprep.subr.bf16.mxu0 0
        %665 = vmatpush1.bf16.xpose.msra.mxu0 %v626
        %666 = vmatprep.subr.bf16.mxu0 0
        %667 = vmatpush1.bf16.xpose.msra.mxu0 %v627
        %668 = vmatprep.subr.bf16.mxu0 0
        %669 = vmatpush1.bf16.xpose.msra.mxu0 %v628
        %670 = vmatprep.subr.bf16.mxu0 0
        %671 = vmatpush1.bf16.xpose.msra.mxu0 %v629
        %672 = vmatprep.subr.bf16.mxu0 0
        %673 = vmatpush1.bf16.xpose.msra.mxu0 %v630
        %674 = vmatprep.subr.bf16.mxu0 0
        %675 = vmatpush1.bf16.xpose.msra.mxu0 %v631
        %676 = vmatprep.subr.bf16.mxu0 0
        %677 = vmatpush1.bf16.xpose.msra.mxu0 %v632
        %678 = vmatprep.subr.bf16.mxu0 0
        %679 = vmatpush1.bf16.xpose.msra.mxu0 %v633
        %680 = vmatprep.subr.bf16.mxu0 0
        %681 = vmatpush1.bf16.xpose.msra.mxu0 %v634
        %682 = vmatprep.subr.bf16.mxu0 0
        %683 = vmatpush1.bf16.xpose.msra.mxu0 %v635
        %684 = vmatprep.subr.bf16.mxu0 0
        %685 = vmatpush1.bf16.xpose.msra.mxu0 %v636
        %686 = vmatprep.mubr.bf16.mxu0 0
        %687 = vmatmul.mubr.bf16.gmra.mrb[0].mxu0 %v653
        %v688 = vpop.f32.mrb[0].mxu0
        %v689 = vadd.f32 0.0, %v688
        %v690 = vpop.f32.mrb[0].mxu0
        %v691 = vadd.f32 0.0, %v690
        %v692 = vpop.f32.mrb[0].mxu0
        %v693 = vpop.f32.mrb[0].mxu0
        %694 = vdwg.mxu0
        %695 = vmatprep.subr.bf16.mxu0 0
        %696 = vmatpush1.bf16.xpose.msra.mxu0 %v637
        %697 = vmatprep.subr.bf16.mxu0 0
        %698 = vmatpush1.bf16.xpose.msra.mxu0 %v638
        %699 = vmatprep.subr.bf16.mxu0 0
        %700 = vmatpush1.bf16.xpose.msra.mxu0 %v639
        %701 = vmatprep.subr.bf16.mxu0 0
        %702 = vmatpush1.bf16.xpose.msra.mxu0 %v640
        %703 = vmatprep.subr.bf16.mxu0 0
        %704 = vmatpush1.bf16.xpose.msra.mxu0 %v641
        %705 = vmatprep.subr.bf16.mxu0 0
        %706 = vmatpush1.bf16.xpose.msra.mxu0 %v642
        %707 = vmatprep.subr.bf16.mxu0 0
        %708 = vmatpush1.bf16.xpose.msra.mxu0 %v643
        %709 = vmatprep.subr.bf16.mxu0 0
        %710 = vmatpush1.bf16.xpose.msra.mxu0 %v644
        %711 = vmatprep.subr.bf16.mxu0 0
        %712 = vmatpush1.bf16.xpose.msra.mxu0 %v645
        %713 = vmatprep.subr.bf16.mxu0 0
        %714 = vmatpush1.bf16.xpose.msra.mxu0 %v646
        %715 = vmatprep.subr.bf16.mxu0 0
        %716 = vmatpush1.bf16.xpose.msra.mxu0 %v647
        %717 = vmatprep.subr.bf16.mxu0 0
        %718 = vmatpush1.bf16.xpose.msra.mxu0 %v648
        %719 = vmatprep.subr.bf16.mxu0 0
        %720 = vmatpush1.bf16.xpose.msra.mxu0 %v649
        %721 = vmatprep.subr.bf16.mxu0 0
        %722 = vmatpush1.bf16.xpose.msra.mxu0 %v650
        %723 = vmatprep.subr.bf16.mxu0 0
        %724 = vmatpush1.bf16.xpose.msra.mxu0 %v651
        %725 = vmatprep.subr.bf16.mxu0 0
        %726 = vmatpush1.bf16.xpose.msra.mxu0 %v652
        %727 = vmatprep.mubr.bf16.mxu0 0
        %728 = vmatmul.mubr.bf16.gmra.mrb[0].mxu0 %v653
        %v729 = vpop.f32.mrb[0].mxu0
        %v730 = vadd.f32 0.0, %v729
        %v731 = vpop.f32.mrb[0].mxu0
        %v732 = vadd.f32 0.0, %v731
        %v733 = vpop.f32.mrb[0].mxu0
        %v734 = vpop.f32.mrb[0].mxu0
        %735 = vdwg.mxu0
        %v736 = vlaneseq
        %v737 = vand.u32 %v736, 127
        %v738 = vadd.s32 %v737, 128
        %v739 = vadd.s32 %v737, 256
        %v740 = vadd.s32 %v737, 384
        %s741 = smul.u32 %s17, 512
        %v742 = vstv %s741
        %v743 = vadd.s32 %v737, %v742
        %v744 = vadd.s32 %v738, %v742
        %v745 = vadd.s32 %v739, %v742
        %v746 = vadd.s32 %v740, %v742
        %v747 = vld [vmem:[%s2] sm:$0xf]
        %748 = vset.pattern.permute.xlu0 0
        %749 = vperm.xlu0 %748, %v747
        %v750 = vpop.permute.xlu0 %749
        %vm751 = vcmp.eq.s32.totalorder %v743, %v750
        %vm752 = vcmp.eq.s32.totalorder %v744, %v750
        %vm753 = vcmp.eq.s32.totalorder %v745, %v750
        %vm754 = vcmp.eq.s32.totalorder %v746, %v750
        %v755 = vsub.f32 %v689, 0.25
        %v756 = vsub.f32 %v691, 0.25
        %v757 = vsub.f32 %v730, 0.25
        %v758 = vsub.f32 %v732, 0.25
        %v759 = vsel %vm751, %v755, %v689
        %v760 = vsel %vm752, %v756, %v691
        %v761 = vsel %vm753, %v757, %v730
        %v762 = vsel %vm754, %v758, %v732
        %v763 = vmul.f32 %v759, 70.0
        %v764 = vmul.f32 %v760, 70.0
        %v765 = vmul.f32 %v761, 70.0
        %v766 = vmul.f32 %v762, 70.0
        %v771 = vcombine.low %v763, %v764
        %v772 = vcombine.low %v765, %v766
        %775 = vst [vmem:[%s164] sm:$0xff] %v771
        %776 = vst [vmem:[%s164 + $0x8] sm:$0xff] %v772
        %s777 = sand.u32 %s93, 1
        %s778 = scalar_lea.sflag [#allocation3], %s777
        %s779 = sand.u32 %s93, 1
        %s780 = smul.addr %s779, 16
        %s781 = scalar_lea.vmem [#allocation2], %s780
        // Predicated region
        $region33: #{cnn_add_margin_forward.5} parent=31 // pred_check
          %p782 = pneg %p103
        $region34: #{cnn_add_margin_forward.5} parent=31 // pred_check_branch
          %784 = sbr.rel (%p782) target = $region36
        $region35: #{cnn_add_margin_forward.5} parent=31 // pred_region
          %s785 = smul.u32 4, %s17
          %s787 = ssub.s32 256, 256
          %788 = vsyncadd %s778, %s787
          %s789 = smul.addr %s785, 64
          %s790 = scalar_lea.hbm %s3, %s789
          %s792 = sshll.u32 %s781, 4
          %s793 = int_to_ptr.vmem [resolvable:$true] %s792
          %795 = dma.vmem_to_hbm [thread:$0]  %s793, 256, %s790, %s778
        $region36: #{cnn_add_margin_forward.5} parent=31 // pred_fallthru
          _
      $region32: #{cnn_add_margin_forward.5} parent=5 // pred_fallthru
        _
      %p796 = scmp.le.s32.totalorder 2, %s12
      // Predicated region
      $region37: #{cnn_add_margin_forward.5} parent=5 // pred_check
        %p797 = pneg %p796
      $region38: #{cnn_add_margin_forward.5} parent=5 // pred_check_branch
        %799 = sbr.rel (%p797) target = $region40
      $region39: #{cnn_add_margin_forward.5} parent=5 // pred_region
        %s800 = ssub.s32 %s12, 2
        // Predicated region
        $region41: #{cnn_add_margin_forward.5} parent=39 // pred_check
          %p801 = pneg %p109
        $region42: #{cnn_add_margin_forward.5} parent=39 // pred_check_branch
          %803 = sbr.rel (%p801) target = $region44
        $region43: #{cnn_add_margin_forward.5} parent=39 // pred_region
          %s804 = sand.u32 %s94, 1
          %s805 = scalar_lea.sflag [#allocation3], %s804
          %s806 = sand.u32 %s94, 1
          %s807 = smul.addr %s806, 16
          %s808 = scalar_lea.vmem [#allocation2], %s807
          %809 = dma.done %s805, 256
        $region44: #{cnn_add_margin_forward.5} parent=39 // pred_fallthru
          _
      $region40: #{cnn_add_margin_forward.5} parent=5 // pred_fallthru
        _
    $region6: #{cnn_add_margin_forward.5} parent=1 // loop_footer
      %s16 = sadd.s32 1, %s12
    $region7: #{cnn_add_margin_forward.5} parent=1 // loop_footer_branch
      %11 = sbr.rel target = $region3
    $region8: #{cnn_add_margin_forward.5} parent=1 // loop_exit
      _
    %810 = vsyncpa [#allocation3], 1
    %s811 = scalar_lea.sflag [#allocation3], 1
    %812 = vsyncpa %s811, 1

</llo_original>
